<compile_context>
chip_gen: v5e
topology: v5e:2x2
jax: 0.10.0
libtpu: 0.0.40
codegen_flags: <defaults>
</compile_context>

<pallas_src>
import functools

import jax
import jax.numpy as jnp
from jax.experimental import pallas as pl
from jax.experimental.pallas import tpu as pltpu

DIM_PN = 1024
EPS = 1e-5


# ----------------------------------------------------------------------------
# Kernels
# ----------------------------------------------------------------------------
def feat_kernel(x_ref, w1_ref, b1_ref, w2_ref, b2_ref, w3_ref, b3_ref,
                out_ref, acc_ref, *, pad_rows):
    """Point MLP 3->64->128->1024 and running max over point tiles.

    Grid = (batch, point_splits, point_tiles).  x block: (1, 3, TILE_N),
    channel-first, points on the lane axis.  acc_ref: (1, 1024) f32 running
    max of the *pre-bias* layer-3 output; relu(max + b3) is applied once in
    the finalize step and written as bf16.
    """
    t = pl.program_id(2)
    last_t = pl.num_programs(2) - 1

    @pl.when(t == 0)
    def _init():
        acc_ref[...] = jnp.full_like(acc_ref, -jnp.inf)

    xb = x_ref[0]                                    # (3, TILE_N) f32

    # ---- layer 1 (K=3): three VPU broadcast-FMAs, channel-first ----
    w1 = w1_ref[...]                                 # (64, 3) f32
    h = (w1[:, 0:1] * xb[0:1, :]
         + w1[:, 1:2] * xb[1:2, :]
         + w1[:, 2:3] * xb[2:3, :]
         + b1_ref[...])                              # (64, TILE_N) f32
    # ReLU, cast to bf16 BEFORE the transpose, then one small XLU transpose
    # of the 64-channel bf16 tensor -> everything downstream is channel-last.
    h = jnp.maximum(h, 0.0).astype(jnp.bfloat16)
    h = jnp.transpose(h)                             # (TILE_N, 64) bf16

    # ---- layer 2 (64 -> 128): channel-last MXU, lane-dense (1,128) bias ----
    h = jnp.dot(h, w2_ref[...], preferred_element_type=jnp.float32)
    h = jnp.maximum(h + b2_ref[...], 0.0).astype(jnp.bfloat16)   # (TILE_N,128)

    # ---- layer 3 (128 -> 1024): dominant MXU matmul.  Bias + ReLU deferred
    # past the max (b3 constant over points, ReLU monotone). ----
    h = jnp.dot(h, w3_ref[...], preferred_element_type=jnp.float32)  # (TILE_N,1024)

    if pad_rows > 0:
        # Only the globally last tile contains host padding; mask it with
        # -inf so padded columns can never win the max.  Static guard: the
        # masked VPU pass is only ever emitted/executed for that one tile.
        last_s = pl.num_programs(1) - 1
        is_pad_tile = jnp.logical_and(pl.program_id(1) == last_s, t == last_t)

        @pl.when(is_pad_tile)
        def _masked_max():
            rows = jax.lax.broadcasted_iota(jnp.int32, h.shape, 0)
            hm = jnp.where(rows < (h.shape[0] - pad_rows), h, -jnp.inf)
            acc_ref[...] = jnp.maximum(acc_ref[...],
                                       jnp.max(hm, axis=0, keepdims=True))

        @pl.when(jnp.logical_not(is_pad_tile))
        def _full_max():
            acc_ref[...] = jnp.maximum(acc_ref[...],
                                       jnp.max(h, axis=0, keepdims=True))
    else:
        acc_ref[...] = jnp.maximum(acc_ref[...],
                                   jnp.max(h, axis=0, keepdims=True))

    @pl.when(t == last_t)
    def _finalize():
        out_ref[0] = jnp.maximum(acc_ref[...] + b3_ref[...],
                                 0.0).astype(out_ref.dtype)


def head_kernel(f_ref, w1_ref, b1_ref, w2_ref, b2_ref, w3_ref, b3_ref, out_ref):
    """FC head 1024->512->256->9; BN folded; 3x3 identity folded into b3.

    f_ref: (B, n_splits, 1024) bf16 per-split partial maxes; combined here.
    bf16 MXU inputs, f32 accumulation; epilogue math in f32.
    """
    f = jnp.max(f_ref[...].astype(jnp.float32), axis=1)      # (B, 1024) f32
    f = f.astype(jnp.bfloat16)
    h = jnp.dot(f, w1_ref[...], preferred_element_type=jnp.float32)
    h = jnp.maximum(h + b1_ref[...], 0.0).astype(jnp.bfloat16)    # (B, 512)
    h = jnp.dot(h, w2_ref[...], preferred_element_type=jnp.float32)
    h = jnp.maximum(h + b2_ref[...], 0.0)                          # (B, 256) f32
    out_ref[...] = jnp.dot(h, w3_ref[...],
                           preferred_element_type=jnp.float32) + b3_ref[...]


# ----------------------------------------------------------------------------
# Wrapper
# ----------------------------------------------------------------------------
def _choose_tiling(n, tile_n=None, max_tile=1024):
    """Pick a lane-aligned point tile; ragged N is handled by padding, never
    by an unbounded full-N tile (keeps VMEM bounded for any point count)."""
    if tile_n is None:
        r128 = ((n + 127) // 128) * 128       # round up to a lane multiple
        tile_n = min(max_tile, r128)
    assert tile_n % 128 == 0, "tile_n must be a multiple of 128 lanes"
    n_tiles = -(-n // tile_n)                 # ceil
    n_padded = n_tiles * tile_n
    return tile_n, n_padded, n_tiles


def stn3d_forward(x_ncw, params, tile_n=None, n_splits=None, max_tile=1024):
    """x_ncw: (B, 3, N) float32 (PyTorch NCW layout). Returns (B, 3, 3)."""
    B, C, N = x_ncw.shape
    assert C == 3

    tile_n, n_padded, n_tiles = _choose_tiling(N, tile_n, max_tile)
    pad_rows = n_padded - N
    if pad_rows:
        # Padded columns are masked with -inf inside the kernel before max.
        x_ncw = jnp.pad(x_ncw, ((0, 0), (0, 0), (0, pad_rows)))

    # v7x megacore: if the batch axis alone can't feed both TensorCores,
    # split the point axis into parallel partial-max groups (combined in the
    # head kernel).  No effect on single-TC v5e/v6e.
    if n_splits is None:
        n_splits = 2 if (B == 1 and n_tiles >= 2 and n_tiles % 2 == 0) else 1
    assert n_tiles % n_splits == 0
    tiles_per_split = n_tiles // n_splits

    (w1, b1), (w2, b2), (w3, b3) = params["conv"]
    (fw1, fb1), (fw2, fb2), (fw3, fb3) = params["fc"]

    def const_spec(shape):
        # Weights/biases: constant block index across the whole grid.
        # TODO(synk): pipeline_mode=pl.Buffered(1) would drop their dead
        # second buffer (~0.6 MiB); skipped for portability, the extra buffer
        # is included in the vmem_limit_bytes budget below.
        return pl.BlockSpec(shape, lambda b, s, t: (0,) * len(shape))

    vmem_limit = (48 if tile_n >= 2048 else 32) * 1024 * 1024

    # ---- kernel 1: point MLP + running max ----
    feats = pl.pallas_call(
        functools.partial(feat_kernel, pad_rows=pad_rows),
        out_shape=jax.ShapeDtypeStruct((B, n_splits, DIM_PN), jnp.bfloat16),
        grid_spec=pltpu.PrefetchScalarGridSpec(
            num_scalar_prefetch=0,
            grid=(B, n_splits, tiles_per_split),
            in_specs=[
                pl.BlockSpec((1, 3, tile_n),
                             lambda b, s, t: (b, 0, s * tiles_per_split + t)),
                const_spec(w1.shape), const_spec(b1.shape),
                const_spec(w2.shape), const_spec(b2.shape),
                const_spec(w3.shape), const_spec(b3.shape),
            ],
            out_specs=pl.BlockSpec((1, 1, DIM_PN), lambda b, s, t: (b, s, 0)),
            scratch_shapes=[pltpu.VMEM((1, DIM_PN), jnp.float32)],
        ),
        compiler_params=pltpu.CompilerParams(
            # batch & point-split "parallel" (megacore); point tiles reduce.
            dimension_semantics=("parallel", "parallel", "arbitrary"),
            vmem_limit_bytes=vmem_limit,
        ),
    )(x_ncw, w1, b1, w2, b2, w3, b3)

    # ---- kernel 2: tiny FC head over the whole batch (one step) ----
    def full_spec(shape):
        return pl.BlockSpec(shape, lambda i: (0,) * len(shape))

    out9 = pl.pallas_call(
        head_kernel,
        out_shape=jax.ShapeDtypeStruct((B, 9), jnp.float32),
        grid_spec=pltpu.PrefetchScalarGridSpec(
            num_scalar_prefetch=0,
            grid=(1,),
            in_specs=[
                full_spec((B, n_splits, DIM_PN)),
                full_spec(fw1.shape), full_spec(fb1.shape),
                full_spec(fw2.shape), full_spec(fb2.shape),
                full_spec(fw3.shape), full_spec(fb3.shape),
            ],
            out_specs=full_spec((B, 9)),
        ),
        compiler_params=pltpu.CompilerParams(
            vmem_limit_bytes=32 * 1024 * 1024),
    )(feats, fw1, fb1, fw2, fb2, fw3, fb3)

    return out9.reshape(B, 3, 3)


# ----------------------------------------------------------------------------
# Deterministic parameter construction (BN folded, eval mode, kernel layouts)
# ----------------------------------------------------------------------------
def make_params(key):
    def dense(k, cin, cout, scale=0.05):
        kw, kb = jax.random.split(k)
        w = scale * jax.random.normal(kw, (cin, cout), jnp.float32)
        b = scale * jax.random.normal(kb, (cout,), jnp.float32)
        return w, b

    def bn(k, c):
        kg, kb, km, kv = jax.random.split(k, 4)
        gamma = 1.0 + 0.1 * jax.random.normal(kg, (c,), jnp.float32)
        beta = 0.1 * jax.random.normal(kb, (c,), jnp.float32)
        mean = 0.1 * jax.random.normal(km, (c,), jnp.float32)
        var = 1.0 + 0.1 * jax.random.uniform(kv, (c,), jnp.float32)
        return gamma, beta, mean, var

    def fold(w_cl, b, gamma, beta, mean, var):
        # y = gamma * ((x @ w_cl + b) - mean) / sqrt(var+eps) + beta
        s = gamma / jnp.sqrt(var + EPS)
        return w_cl * s[None, :], (b - mean) * s + beta

    ks = jax.random.split(key, 11)

    # conv1 (3 -> 64): channel-first (C_out, C_in) f32 for the VPU FMA path.
    w, b = dense(ks[0], 3, 64)
    w1, b1 = fold(w, b, *bn(ks[3], 64))
    w1, b1 = jnp.transpose(w1), b1[:, None]                     # (64,3),(64,1)

    # conv2 (64 -> 128): channel-last (C_in, C_out), bf16 for the MXU.
    w, b = dense(ks[1], 64, 128)
    w2, b2 = fold(w, b, *bn(ks[4], 128))
    w2 = w2.astype(jnp.bfloat16)                                # (64, 128)
    b2 = b2[None, :]                                            # (1, 128) f32

    # conv3 (128 -> 1024): channel-last (C_in, C_out), bf16 for the MXU.
    w, b = dense(ks[2], 128, DIM_PN)
    w3, b3 = fold(w, b, *bn(ks[5], DIM_PN))
    w3 = w3.astype(jnp.bfloat16)                                # (128, 1024)
    b3 = b3[None, :]                                            # (1, 1024) f32

    # fc head: fc1/fc2 bf16 MXU weights, f32 biases; BN4/BN5 folded;
    # 3x3 identity folded into fc3 bias.
    w, b = dense(ks[6], DIM_PN, 512)
    fw1, fb1 = fold(w, b, *bn(ks[8], 512))
    fw1 = fw1.astype(jnp.bfloat16)                              # (1024, 512)
    w, b = dense(ks[7], 512, 256)
    fw2, fb2 = fold(w, b, *bn(ks[9], 256))
    fw2 = fw2.astype(jnp.bfloat16)                              # (512, 256)
    fw3, fb3 = dense(ks[10], 256, 9)                            # (256, 9) f32
    iden = jnp.array([1, 0, 0, 0, 1, 0, 0, 0, 1], jnp.float32)
    fb3 = fb3 + iden

    return {
        "conv": ((w1, b1), (w2, b2), (w3, b3)),
        "fc": ((fw1, fb1[None, :]), (fw2, fb2[None, :]), (fw3, fb3[None, :])),
    }


# Pure-JAX reference with the same folded params and the same mixed precision
# (bf16 MXU inputs, f32 accumulation, deferred layer-3 bias/ReLU) for a tight
# correctness check; f32 contractions pinned to HIGHEST precision.
def reference_forward(x_ncw, params):
    (w1, b1), (w2, b2), (w3, b3) = params["conv"]
    (fw1, fb1), (fw2, fb2), (fw3, fb3) = params["fc"]
    hp = jax.lax.Precision.HIGHEST
    h = jnp.einsum("bcn,oc->bno", x_ncw, w1, precision=hp) + b1[:, 0][None, None, :]
    h = jnp.maximum(h, 0.0).astype(jnp.bfloat16)                    # (B,N,64)
    h = jnp.einsum("bnc,co->bno", h, w2,
                   preferred_element_type=jnp.float32) + b2[None]   # (B,N,128)
    h = jnp.maximum(h, 0.0).astype(jnp.bfloat16)
    h = jnp.einsum("bnc,co->bno", h, w3,
                   preferred_element_type=jnp.float32)              # (B,N,1024)
    f = jnp.max(h, axis=1)                                          # (B,1024)
    f = jnp.maximum(f + b3, 0.0).astype(jnp.bfloat16)               # deferred bias+relu
    h = jnp.dot(f, fw1, preferred_element_type=jnp.float32) + fb1
    h = jnp.maximum(h, 0.0).astype(jnp.bfloat16)
    h = jnp.dot(h, fw2, preferred_element_type=jnp.float32) + fb2
    h = jnp.maximum(h, 0.0)
    y = jnp.dot(h, fw3, precision=hp) + fb3                         # iden folded
    return y.reshape(-1, 3, 3)


if __name__ == "__main__":
    key = jax.random.PRNGKey(0)
    kx1, kx2, kp = jax.random.split(key, 3)
    params = make_params(kp)

    # Case 1: B=2, N=512, tile_n=256 -> 2 point tiles per batch element
    # (exercises the running-max accumulator; no padding, no point split).
    x1 = jax.random.normal(kx1, (2, 3, 512), jnp.float32)
    out1 = jax.block_until_ready(stn3d_forward(x1, params, tile_n=256))
    assert out1.shape == (2, 3, 3)
    ref1 = reference_forward(x1, params)
    assert jnp.allclose(out1, ref1, atol=1e-2, rtol=1e-2), "case1 mismatch"

    # Case 2: B=1, N=1000 (ragged), tile_n=256 -> padded to 1024, 4 tiles,
    # n_splits=2 (v7x point-axis split) + padded-column masking.
    x2 = jax.random.normal(kx2, (1, 3, 1000), jnp.float32)
    out2 = jax.block_until_ready(stn3d_forward(x2, params, tile_n=256))
    assert out2.shape == (1, 3, 3)
    ref2 = reference_forward(x2, params)
    assert jnp.allclose(out2, ref2, atol=1e-2, rtol=1e-2), "case2 mismatch"

    print("KERNEL_OK")
</pallas_src>

<mosaic_0001>
module attributes {stable_mosaic.version = 11 : i64} {
  func.func @feat_kernel(%arg0: i32, %arg1: i32, %arg2: i32, %arg3: memref<1x3x256xf32, #tpu.memory_space<vmem>>, %arg4: memref<64x3xf32, #tpu.memory_space<vmem>>, %arg5: memref<64x1xf32, #tpu.memory_space<vmem>>, %arg6: memref<64x128xbf16, #tpu.memory_space<vmem>>, %arg7: memref<1x128xf32, #tpu.memory_space<vmem>>, %arg8: memref<128x1024xbf16, #tpu.memory_space<vmem>>, %arg9: memref<1x1024xf32, #tpu.memory_space<vmem>>, %arg10: memref<1x1x1024xbf16, #tpu.memory_space<vmem>>, %arg11: memref<1x1024xf32, #tpu.memory_space<vmem>>) attributes {dimension_semantics = [#tpu.dimension_semantics<parallel>, #tpu.dimension_semantics<parallel>, #tpu.dimension_semantics<arbitrary>], iteration_bounds = array<i64: 2, 1, 2>, scalar_prefetch = 0 : i64, scratch_operands = 1 : i64, tpu.core_type = #tpu.core_type<tc>, window_params = [{transform_indices = @transform_0, window_bounds = array<i64: 1, 3, 256>}, {pipeline_mode = #tpu.pipeline_mode<synchronous>, transform_indices = @transform_1, window_bounds = array<i64: 64, 3>}, {pipeline_mode = #tpu.pipeline_mode<synchronous>, transform_indices = @transform_2, window_bounds = array<i64: 64, 1>}, {pipeline_mode = #tpu.pipeline_mode<synchronous>, transform_indices = @transform_3, window_bounds = array<i64: 64, 128>}, {pipeline_mode = #tpu.pipeline_mode<synchronous>, transform_indices = @transform_4, window_bounds = array<i64: 1, 128>}, {pipeline_mode = #tpu.pipeline_mode<synchronous>, transform_indices = @transform_5, window_bounds = array<i64: 128, 1024>}, {pipeline_mode = #tpu.pipeline_mode<synchronous>, transform_indices = @transform_6, window_bounds = array<i64: 1, 1024>}, {transform_indices = @transform_7, window_bounds = array<i64: 1, 1, 1024>}]} {
    %c0_i32 = arith.constant 0 : i32
    %0 = arith.cmpi eq, %arg2, %c0_i32 : i32
    %1 = arith.extui %0 : i1 to i32
    %c0_i32_0 = arith.constant 0 : i32
    %2 = arith.cmpi ne, %1, %c0_i32_0 : i32
    scf.if %2 {
      %cst_22 = arith.constant 0xFF800000 : f32
      %48 = vector.broadcast %cst_22 : f32 to vector<1x1024xf32>
      %c0_23 = arith.constant 0 : index
      %c0_24 = arith.constant 0 : index
      %49 = vector.load %arg11[%c0_23, %c0_24] : memref<1x1024xf32, #tpu.memory_space<vmem>>, vector<1x1024xf32>
      tpu.vector_store %arg11[%c0_23, %c0_24], %48 {strides = array<i32>} : memref<1x1024xf32, #tpu.memory_space<vmem>>, vector<1x1024xf32>,
    } else {
    }
    %c0 = arith.constant 0 : index
    %c0_1 = arith.constant 0 : index
    %c0_2 = arith.constant 0 : index
    %3 = vector.load %arg3[%c0, %c0_1, %c0_2] : memref<1x3x256xf32, #tpu.memory_space<vmem>>, vector<1x3x256xf32>
    %4 = vector.shape_cast %3 : vector<1x3x256xf32> to vector<3x256xf32>
    %c0_3 = arith.constant 0 : index
    %c0_4 = arith.constant 0 : index
    %5 = vector.load %arg4[%c0_3, %c0_4] : memref<64x3xf32, #tpu.memory_space<vmem>>, vector<64x3xf32>
    %6 = vector.extract_strided_slice %5 {offsets = [0, 0], sizes = [64, 1], strides = [1, 1]} : vector<64x3xf32> to vector<64x1xf32>
    %7 = vector.extract_strided_slice %4 {offsets = [0, 0], sizes = [1, 256], strides = [1, 1]} : vector<3x256xf32> to vector<1x256xf32>
    %8 = vector.broadcast %6 : vector<64x1xf32> to vector<64x256xf32>
    %9 = vector.broadcast %7 : vector<1x256xf32> to vector<64x256xf32>
    %10 = arith.mulf %8, %9 : vector<64x256xf32>
    %11 = vector.extract_strided_slice %5 {offsets = [0, 1], sizes = [64, 1], strides = [1, 1]} : vector<64x3xf32> to vector<64x1xf32>
    %12 = vector.extract_strided_slice %4 {offsets = [1, 0], sizes = [1, 256], strides = [1, 1]} : vector<3x256xf32> to vector<1x256xf32>
    %13 = vector.broadcast %11 : vector<64x1xf32> to vector<64x256xf32>
    %14 = vector.broadcast %12 : vector<1x256xf32> to vector<64x256xf32>
    %15 = arith.mulf %13, %14 : vector<64x256xf32>
    %16 = arith.addf %10, %15 : vector<64x256xf32>
    %17 = vector.extract_strided_slice %5 {offsets = [0, 2], sizes = [64, 1], strides = [1, 1]} : vector<64x3xf32> to vector<64x1xf32>
    %18 = vector.extract_strided_slice %4 {offsets = [2, 0], sizes = [1, 256], strides = [1, 1]} : vector<3x256xf32> to vector<1x256xf32>
    %19 = vector.broadcast %17 : vector<64x1xf32> to vector<64x256xf32>
    %20 = vector.broadcast %18 : vector<1x256xf32> to vector<64x256xf32>
    %21 = arith.mulf %19, %20 : vector<64x256xf32>
    %22 = arith.addf %16, %21 : vector<64x256xf32>
    %c0_5 = arith.constant 0 : index
    %c0_6 = arith.constant 0 : index
    %23 = vector.load %arg5[%c0_5, %c0_6] : memref<64x1xf32, #tpu.memory_space<vmem>>, vector<64x1xf32>
    %24 = vector.broadcast %23 : vector<64x1xf32> to vector<64x256xf32>
    %25 = arith.addf %22, %24 : vector<64x256xf32>
    %cst = arith.constant 0.000000e+00 : f32
    %26 = vector.broadcast %cst : f32 to vector<64x256xf32>
    %27 = arith.maximumf %25, %26 : vector<64x256xf32>
    %28 = arith.truncf %27 : vector<64x256xf32> to vector<64x256xbf16>
    %29 = tpu.transpose %28, [1, 0] : vector<64x256xbf16> -> vector<256x64xbf16>
    %c0_7 = arith.constant 0 : index
    %c0_8 = arith.constant 0 : index
    %30 = vector.load %arg6[%c0_7, %c0_8] : memref<64x128xbf16, #tpu.memory_space<vmem>>, vector<64x128xbf16>
    %cst_9 = arith.constant dense<0.000000e+00> : vector<256x128xf32>
    %31 = tpu.matmul %29, %30, %cst_9 {dimension_numbers = #tpu.dot_dimension_numbers<[1], [0], [0], [1], [0, 0, 1, 1], [], []>} : vector<256x64xbf16>, vector<64x128xbf16>, vector<256x128xf32> -> vector<256x128xf32>
    %c0_10 = arith.constant 0 : index
    %c0_11 = arith.constant 0 : index
    %32 = vector.load %arg7[%c0_10, %c0_11] : memref<1x128xf32, #tpu.memory_space<vmem>>, vector<1x128xf32>
    %33 = vector.broadcast %32 : vector<1x128xf32> to vector<256x128xf32>
    %34 = arith.addf %31, %33 : vector<256x128xf32>
    %cst_12 = arith.constant 0.000000e+00 : f32
    %35 = vector.broadcast %cst_12 : f32 to vector<256x128xf32>
    %36 = arith.maximumf %34, %35 : vector<256x128xf32>
    %37 = arith.truncf %36 : vector<256x128xf32> to vector<256x128xbf16>
    %c0_13 = arith.constant 0 : index
    %c0_14 = arith.constant 0 : index
    %38 = vector.load %arg8[%c0_13, %c0_14] : memref<128x1024xbf16, #tpu.memory_space<vmem>>, vector<128x1024xbf16>
    %cst_15 = arith.constant dense<0.000000e+00> : vector<256x1024xf32>
    %39 = tpu.matmul %37, %38, %cst_15 {dimension_numbers = #tpu.dot_dimension_numbers<[1], [0], [0], [1], [0, 0, 1, 1], [], []>} : vector<256x128xbf16>, vector<128x1024xbf16>, vector<256x1024xf32> -> vector<256x1024xf32>
    %c0_16 = arith.constant 0 : index
    %c0_17 = arith.constant 0 : index
    %40 = vector.load %arg11[%c0_16, %c0_17] : memref<1x1024xf32, #tpu.memory_space<vmem>>, vector<1x1024xf32>
    %cst_18 = arith.constant dense<0xFF800000> : vector<1024xf32>
    %41 = vector.multi_reduction <maximumf>, %39, %cst_18 [0] : vector<256x1024xf32> to vector<1024xf32>
    %42 = vector.shape_cast %41 : vector<1024xf32> to vector<1x1024xf32>
    %43 = arith.maximumf %40, %42 : vector<1x1024xf32>
    %c0_19 = arith.constant 0 : index
    %c0_20 = arith.constant 0 : index
    %44 = vector.load %arg11[%c0_19, %c0_20] : memref<1x1024xf32, #tpu.memory_space<vmem>>, vector<1x1024xf32>
    tpu.vector_store %arg11[%c0_19, %c0_20], %43 {strides = array<i32>} : memref<1x1024xf32, #tpu.memory_space<vmem>>, vector<1x1024xf32>,
    %c1_i32 = arith.constant 1 : i32
    %45 = arith.cmpi eq, %arg2, %c1_i32 : i32
    %46 = arith.extui %45 : i1 to i32
    %c0_i32_21 = arith.constant 0 : i32
    %47 = arith.cmpi ne, %46, %c0_i32_21 : i32
    scf.if %47 {
      %c0_22 = arith.constant 0 : index
      %c0_23 = arith.constant 0 : index
      %48 = vector.load %arg11[%c0_22, %c0_23] : memref<1x1024xf32, #tpu.memory_space<vmem>>, vector<1x1024xf32>
      %c0_24 = arith.constant 0 : index
      %c0_25 = arith.constant 0 : index
      %49 = vector.load %arg9[%c0_24, %c0_25] : memref<1x1024xf32, #tpu.memory_space<vmem>>, vector<1x1024xf32>
      %50 = arith.addf %48, %49 : vector<1x1024xf32>
      %cst_26 = arith.constant 0.000000e+00 : f32
      %51 = vector.broadcast %cst_26 : f32 to vector<1x1024xf32>
      %52 = arith.maximumf %50, %51 : vector<1x1024xf32>
      %53 = arith.truncf %52 : vector<1x1024xf32> to vector<1x1024xbf16>
      %c0_27 = arith.constant 0 : index
      %c0_28 = arith.constant 0 : index
      %c0_29 = arith.constant 0 : index
      %54 = vector.load %arg10[%c0_27, %c0_28, %c0_29] : memref<1x1x1024xbf16, #tpu.memory_space<vmem>>, vector<1x1x1024xbf16>
      %55 = vector.shape_cast %54 : vector<1x1x1024xbf16> to vector<1x1024xbf16>
      %56 = vector.shape_cast %53 : vector<1x1024xbf16> to vector<1x1x1024xbf16>
      tpu.vector_store %arg10[%c0_27, %c0_28, %c0_29], %56 {strides = array<i32>} : memref<1x1x1024xbf16, #tpu.memory_space<vmem>>, vector<1x1x1024xbf16>,
    } else {
    }
    return
  }
  func.func @transform_0(%arg0: i32, %arg1: i32, %arg2: i32) -> (i32, i32, i32) {
    %c2_i32 = arith.constant 2 : i32
    %0 = arith.muli %arg1, %c2_i32 : i32
    %1 = arith.addi %0, %arg2 : i32
    %c0_i32 = arith.constant 0 : i32
    %c0_i32_0 = arith.constant 0 : i32
    return %arg0, %c0_i32, %1 : i32, i32, i32
  }
  func.func @transform_1(%arg0: i32, %arg1: i32, %arg2: i32) -> (i32, i32) {
    %c0_i32 = arith.constant 0 : i32
    %c0_i32_0 = arith.constant 0 : i32
    %c0_i32_1 = arith.constant 0 : i32
    return %c0_i32, %c0_i32_0 : i32, i32
  }
  func.func @transform_2(%arg0: i32, %arg1: i32, %arg2: i32) -> (i32, i32) {
    %c0_i32 = arith.constant 0 : i32
    %c0_i32_0 = arith.constant 0 : i32
    %c0_i32_1 = arith.constant 0 : i32
    return %c0_i32, %c0_i32_0 : i32, i32
  }
  func.func @transform_3(%arg0: i32, %arg1: i32, %arg2: i32) -> (i32, i32) {
    %c0_i32 = arith.constant 0 : i32
    %c0_i32_0 = arith.constant 0 : i32
    %c0_i32_1 = arith.constant 0 : i32
    return %c0_i32, %c0_i32_0 : i32, i32
  }
  func.func @transform_4(%arg0: i32, %arg1: i32, %arg2: i32) -> (i32, i32) {
    %c0_i32 = arith.constant 0 : i32
    %c0_i32_0 = arith.constant 0 : i32
    %c0_i32_1 = arith.constant 0 : i32
    return %c0_i32, %c0_i32_0 : i32, i32
  }
  func.func @transform_5(%arg0: i32, %arg1: i32, %arg2: i32) -> (i32, i32) {
    %c0_i32 = arith.constant 0 : i32
    %c0_i32_0 = arith.constant 0 : i32
    %c0_i32_1 = arith.constant 0 : i32
    return %c0_i32, %c0_i32_0 : i32, i32
  }
  func.func @transform_6(%arg0: i32, %arg1: i32, %arg2: i32) -> (i32, i32) {
    %c0_i32 = arith.constant 0 : i32
    %c0_i32_0 = arith.constant 0 : i32
    %c0_i32_1 = arith.constant 0 : i32
    return %c0_i32, %c0_i32_0 : i32, i32
  }
  func.func @transform_7(%arg0: i32, %arg1: i32, %arg2: i32) -> (i32, i32, i32) {
    %c0_i32 = arith.constant 0 : i32
    %c0_i32_0 = arith.constant 0 : i32
    return %arg0, %arg1, %c0_i32 : i32, i32, i32
  }
}

</mosaic_0001>

<llo_original>
// kernel: tpu_custom_call.1
$region0: #{tpu_custom_call.1}
  #allocation0 [shape = 'u32[]', space=smem, size = 0x4, offset = 0x4, fixed_abs, tag = 'smem constant byte address 0x4 - core index']
  #allocation1 [shape = 'u32[72,128]{1,0:T(1,128)}', space=vmem, size = 0x9000, scoped, tag = 'internal scratch']
  #allocation2 [shape = 'f32[1,1024]{1,0:T(1,128)}', space=vmem, size = 0x1000, scoped, tag = 'scratch operand']
  %s0 = inlined_call_operand.vmem [shape: f32[2,3,512], index: 0, kind: input, shape index: {}]
  %s1 = inlined_call_operand.vmem [shape: f32[64,3], index: 1, kind: input, shape index: {}]
  %s2 = inlined_call_operand.vmem [shape: f32[64,1], index: 2, kind: input, shape index: {}]
  %s3 = inlined_call_operand.vmem [shape: bf16[64,128], index: 3, kind: input, shape index: {}]
  %s4 = inlined_call_operand.vmem [shape: f32[1,128], index: 4, kind: input, shape index: {}]
  %s5 = inlined_call_operand.hbm [shape: bf16[128,1024], index: 5, kind: input, shape index: {}]
  %s6 = inlined_call_operand.vmem [shape: f32[1,1024], index: 6, kind: input, shape index: {}]
  %s7 = inlined_call_operand.vmem [shape: bf16[2,1,1024], index: 7, kind: output, shape index: {}]
  %s8 = sld [smem:[#allocation0]]
  $region73: #{tpu_custom_call.1} parent=0
    _
  %s10 = ssub.s32 1, %s8
  %s11 = scalar_select 0, %s10, %s8
  $region1: #{tpu_custom_call.1} parent=0
    #allocation3 [shape = 'u8[262144]{0}', space=vmem, size = 0x40000, scoped, tag = 'input window, operand 5, single buffered']
    #allocation4 [shape = 's32[2]{0}', space=sflag, size = 0x8, scoped, tag = 'scoped memory for tpu_custom_call.1']
    %12 = vsyncpa [#allocation4], 0
    loop: start=0, step=1, limit=6
    $region2: #{tpu_custom_call.1} parent=1 // loop_pre_header
      _
    $region3: #{tpu_custom_call.1} parent=1 // loop_header
      %s14 = sphi 0, %s18
      %p15 = scmp.ge.s32.totalorder %s14, 6
      %s21 = sphi 0, %s40
      %s22 = sphi 0, %s36
      %s23 = sphi 0, %s32
      %s24 = sphi 0, %s21
      %s25 = sphi 0, %s22
      %s26 = sphi 0, %s23
      %s27 = sphi 0, %s24
      %s28 = sphi 0, %s25
      %s29 = sphi 0, %s26
      %s49 = sphi 0, %s51
      %s52 = sphi 0, %s49
      %s53 = sphi 0, %s52
      %s69 = sphi 0, %s53
      %s73 = sphi 0, %s73
      %s75 = sphi 0, %s73
      %s76 = sphi 0, %s75
      %s90 = sphi 0, %s76
      %s94 = sphi 0, %s94
      %s96 = sphi 0, %s94
      %s97 = sphi 0, %s96
      %s111 = sphi 0, %s97
      %s115 = sphi 0, %s115
      %s117 = sphi 0, %s115
      %s118 = sphi 0, %s117
      %s132 = sphi 0, %s118
      %s136 = sphi 0, %s136
      %s138 = sphi 0, %s136
      %s139 = sphi 0, %s138
      %s153 = sphi 0, %s139
      %s157 = sphi 0, %s157
      %s159 = sphi 0, %s157
      %s160 = sphi 0, %s159
      %s174 = sphi 0, %s160
      %s178 = sphi 0, %s178
      %s180 = sphi 0, %s178
      %s181 = sphi 0, %s180
      %s195 = sphi 0, %s181
      %s203 = sphi 0, %s205
      %s206 = sphi 0, %s203
      %s207 = sphi 0, %s206
      %s223 = sphi 0, %s207
    $region4: #{tpu_custom_call.1} parent=1 // loop_header_branch
      %17 = sbr.rel (%p15) target = $region8
    $region5: #{tpu_custom_call.1} parent=1 // loop_body
      %s19 = ssub.s32 %s14, 1
      %s20 = ssub.s32 %s14, 2
      %s30 = sadd.s32 1, %s23
      %p31 = scmp.ge.s32.totalorder %s30, 2
      %s32 = scalar_select %p31, 0, %s30
      %s33 = sadd.s32 1, %s22
      %s34 = scalar_select %p31, %s33, %s22
      %p35 = scmp.ge.s32.totalorder %s34, 1
      %s36 = scalar_select %p35, 0, %s34
      %s37 = sadd.s32 1, %s21
      %s38 = scalar_select %p35, %s37, %s21
      %p39 = scmp.ge.s32.totalorder %s38, 2
      %s40 = scalar_select %p39, 0, %s38
      %s41 = smul.u32 %s22, 2
      %s42 = sadd.s32 %s41, %s23
      %s43 = smul.u32 %s36, 2
      %s44 = sadd.s32 %s43, %s32
      %s45 = ssub.s32 %s21, %s40
      %s46 = ssub.s32 %s42, %s44
      %s47 = sor.u32 %s45, %s46
      %p48 = scmp.eq.s32.totalorder %s47, 0
      %s50 = sadd.s32 %s49, 1
      %s51 = scalar_select %p48, %s49, %s50
      %p54 = pneg %p48
      %p55 = scmp.eq.s32.totalorder %s14, 3
      %p56 = por %p54, %p55
      %p57 = scmp.ne.s32.totalorder %s49, %s52
      %p58 = scmp.eq.s32.totalorder %s14, 0
      %p59 = por %p57, %p58
      %p60 = scmp.ne.s32.totalorder %s49, %s52
      %p61 = scmp.eq.s32.totalorder %s19, 3
      %p62 = por %p60, %p61
      %p63 = scmp.ne.s32.totalorder %s52, %s53
      %p64 = scmp.eq.s32.totalorder %s19, 0
      %p65 = por %p63, %p64
      %p66 = scmp.ne.s32.totalorder %s52, %s53
      %p67 = scmp.eq.s32.totalorder %s20, 3
      %p68 = por %p66, %p67
      %p70 = scmp.ne.s32.totalorder %s53, %s69
      %p71 = scmp.eq.s32.totalorder %s20, 0
      %p72 = por %p70, %p71
      %s74 = sadd.s32 %s73, 1
      %p77 = scmp.eq.s32.totalorder %s14, 3
      %p78 = scmp.ne.s32.totalorder %s73, %s75
      %p79 = scmp.eq.s32.totalorder %s14, 0
      %p80 = por %p78, %p79
      %p81 = scmp.ne.s32.totalorder %s73, %s75
      %p82 = scmp.eq.s32.totalorder %s19, 3
      %p83 = por %p81, %p82
      %p84 = scmp.ne.s32.totalorder %s75, %s76
      %p85 = scmp.eq.s32.totalorder %s19, 0
      %p86 = por %p84, %p85
      %p87 = scmp.ne.s32.totalorder %s75, %s76
      %p88 = scmp.eq.s32.totalorder %s20, 3
      %p89 = por %p87, %p88
      %p91 = scmp.ne.s32.totalorder %s76, %s90
      %p92 = scmp.eq.s32.totalorder %s20, 0
      %p93 = por %p91, %p92
      %s95 = sadd.s32 %s94, 1
      %p98 = scmp.eq.s32.totalorder %s14, 3
      %p99 = scmp.ne.s32.totalorder %s94, %s96
      %p100 = scmp.eq.s32.totalorder %s14, 0
      %p101 = por %p99, %p100
      %p102 = scmp.ne.s32.totalorder %s94, %s96
      %p103 = scmp.eq.s32.totalorder %s19, 3
      %p104 = por %p102, %p103
      %p105 = scmp.ne.s32.totalorder %s96, %s97
      %p106 = scmp.eq.s32.totalorder %s19, 0
      %p107 = por %p105, %p106
      %p108 = scmp.ne.s32.totalorder %s96, %s97
      %p109 = scmp.eq.s32.totalorder %s20, 3
      %p110 = por %p108, %p109
      %p112 = scmp.ne.s32.totalorder %s97, %s111
      %p113 = scmp.eq.s32.totalorder %s20, 0
      %p114 = por %p112, %p113
      %s116 = sadd.s32 %s115, 1
      %p119 = scmp.eq.s32.totalorder %s14, 3
      %p120 = scmp.ne.s32.totalorder %s115, %s117
      %p121 = scmp.eq.s32.totalorder %s14, 0
      %p122 = por %p120, %p121
      %p123 = scmp.ne.s32.totalorder %s115, %s117
      %p124 = scmp.eq.s32.totalorder %s19, 3
      %p125 = por %p123, %p124
      %p126 = scmp.ne.s32.totalorder %s117, %s118
      %p127 = scmp.eq.s32.totalorder %s19, 0
      %p128 = por %p126, %p127
      %p129 = scmp.ne.s32.totalorder %s117, %s118
      %p130 = scmp.eq.s32.totalorder %s20, 3
      %p131 = por %p129, %p130
      %p133 = scmp.ne.s32.totalorder %s118, %s132
      %p134 = scmp.eq.s32.totalorder %s20, 0
      %p135 = por %p133, %p134
      %s137 = sadd.s32 %s136, 1
      %p140 = scmp.eq.s32.totalorder %s14, 3
      %p141 = scmp.ne.s32.totalorder %s136, %s138
      %p142 = scmp.eq.s32.totalorder %s14, 0
      %p143 = por %p141, %p142
      %p144 = scmp.ne.s32.totalorder %s136, %s138
      %p145 = scmp.eq.s32.totalorder %s19, 3
      %p146 = por %p144, %p145
      %p147 = scmp.ne.s32.totalorder %s138, %s139
      %p148 = scmp.eq.s32.totalorder %s19, 0
      %p149 = por %p147, %p148
      %p150 = scmp.ne.s32.totalorder %s138, %s139
      %p151 = scmp.eq.s32.totalorder %s20, 3
      %p152 = por %p150, %p151
      %p154 = scmp.ne.s32.totalorder %s139, %s153
      %p155 = scmp.eq.s32.totalorder %s20, 0
      %p156 = por %p154, %p155
      %s158 = sadd.s32 %s157, 1
      %p161 = scmp.eq.s32.totalorder %s14, 3
      %p162 = scmp.ne.s32.totalorder %s157, %s159
      %p163 = scmp.eq.s32.totalorder %s14, 0
      %p164 = por %p162, %p163
      %p165 = scmp.ne.s32.totalorder %s157, %s159
      %p166 = scmp.eq.s32.totalorder %s19, 3
      %p167 = por %p165, %p166
      %p168 = scmp.ne.s32.totalorder %s159, %s160
      %p169 = scmp.eq.s32.totalorder %s19, 0
      %p170 = por %p168, %p169
      %p171 = scmp.ne.s32.totalorder %s159, %s160
      %p172 = scmp.eq.s32.totalorder %s20, 3
      %p173 = por %p171, %p172
      %p175 = scmp.ne.s32.totalorder %s160, %s174
      %p176 = scmp.eq.s32.totalorder %s20, 0
      %p177 = por %p175, %p176
      %s179 = sadd.s32 %s178, 1
      %p182 = scmp.eq.s32.totalorder %s14, 3
      %p183 = scmp.ne.s32.totalorder %s178, %s180
      %p184 = scmp.eq.s32.totalorder %s14, 0
      %p185 = por %p183, %p184
      %p186 = scmp.ne.s32.totalorder %s178, %s180
      %p187 = scmp.eq.s32.totalorder %s19, 3
      %p188 = por %p186, %p187
      %p189 = scmp.ne.s32.totalorder %s180, %s181
      %p190 = scmp.eq.s32.totalorder %s19, 0
      %p191 = por %p189, %p190
      %p192 = scmp.ne.s32.totalorder %s180, %s181
      %p193 = scmp.eq.s32.totalorder %s20, 3
      %p194 = por %p192, %p193
      %p196 = scmp.ne.s32.totalorder %s181, %s195
      %p197 = scmp.eq.s32.totalorder %s20, 0
      %p198 = por %p196, %p197
      %s199 = ssub.s32 %s21, %s40
      %s200 = ssub.s32 %s22, %s36
      %s201 = sor.u32 %s199, %s200
      %p202 = scmp.eq.s32.totalorder %s201, 0
      %s204 = sadd.s32 %s203, 1
      %s205 = scalar_select %p202, %s203, %s204
      %p208 = pneg %p202
      %p209 = scmp.eq.s32.totalorder %s14, 3
      %p210 = por %p208, %p209
      %p211 = scmp.ne.s32.totalorder %s203, %s206
      %p212 = scmp.eq.s32.totalorder %s14, 0
      %p213 = por %p211, %p212
      %p214 = scmp.ne.s32.totalorder %s203, %s206
      %p215 = scmp.eq.s32.totalorder %s19, 3
      %p216 = por %p214, %p215
      %p217 = scmp.ne.s32.totalorder %s206, %s207
      %p218 = scmp.eq.s32.totalorder %s19, 0
      %p219 = por %p217, %p218
      %p220 = scmp.ne.s32.totalorder %s206, %s207
      %p221 = scmp.eq.s32.totalorder %s20, 3
      %p222 = por %p220, %p221
      %p224 = scmp.ne.s32.totalorder %s207, %s223
      %p225 = scmp.eq.s32.totalorder %s20, 0
      %p226 = por %p224, %p225
      %p227 = scmp.le.s32.totalorder 1, %s14
      %p228 = scmp.lt.s32.totalorder %s14, 5
      %p229 = pnand %p227, %p228
      %p230 = pneg %p229
      // Predicated region
      $region9: #{tpu_custom_call.1} parent=5 // pred_check
        _
      $region10: #{tpu_custom_call.1} parent=5 // pred_check_branch
        %232 = sbr.rel (%p229) target = $region12
      $region11: #{tpu_custom_call.1} parent=5 // pred_region
        %s233 = ssub.s32 %s14, 1
        // Predicated region
        $region13: #{tpu_custom_call.1} parent=11 // pred_check
          %p234 = pneg %p86
        $region14: #{tpu_custom_call.1} parent=11 // pred_check_branch
          %236 = sbr.rel (%p234) target = $region16
        $region15: #{tpu_custom_call.1} parent=11 // pred_region
          _
        $region16: #{tpu_custom_call.1} parent=11 // pred_fallthru
          _
        // Predicated region
        $region17: #{tpu_custom_call.1} parent=11 // pred_check
          %p237 = pneg %p107
        $region18: #{tpu_custom_call.1} parent=11 // pred_check_branch
          %239 = sbr.rel (%p237) target = $region20
        $region19: #{tpu_custom_call.1} parent=11 // pred_region
          _
        $region20: #{tpu_custom_call.1} parent=11 // pred_fallthru
          _
        // Predicated region
        $region21: #{tpu_custom_call.1} parent=11 // pred_check
          %p240 = pneg %p128
        $region22: #{tpu_custom_call.1} parent=11 // pred_check_branch
          %242 = sbr.rel (%p240) target = $region24
        $region23: #{tpu_custom_call.1} parent=11 // pred_region
          _
        $region24: #{tpu_custom_call.1} parent=11 // pred_fallthru
          _
        // Predicated region
        $region25: #{tpu_custom_call.1} parent=11 // pred_check
          %p243 = pneg %p149
        $region26: #{tpu_custom_call.1} parent=11 // pred_check_branch
          %245 = sbr.rel (%p243) target = $region28
        $region27: #{tpu_custom_call.1} parent=11 // pred_region
          _
        $region28: #{tpu_custom_call.1} parent=11 // pred_fallthru
          _
        // Predicated region
        $region29: #{tpu_custom_call.1} parent=11 // pred_check
          %p246 = pneg %p170
        $region30: #{tpu_custom_call.1} parent=11 // pred_check_branch
          %248 = sbr.rel (%p246) target = $region32
        $region31: #{tpu_custom_call.1} parent=11 // pred_region
          %250 = vsyncadd [#allocation4], 0
          %s251 = sshll.u32 %s5, 4
          %s252 = int_to_ptr.hbm [resolvable:$true] %s251
          %s253 = sshll.u32 [#allocation3], 4
          %s254 = int_to_ptr.vmem [resolvable:$true] %s253
          %259 = dma.hbm_to_vmem [thread:$0]  %s252, 8192, %s254, [#allocation4], 512, 512, 32
        $region32: #{tpu_custom_call.1} parent=11 // pred_fallthru
          _
        // Predicated region
        $region33: #{tpu_custom_call.1} parent=11 // pred_check
          %p260 = pneg %p191
        $region34: #{tpu_custom_call.1} parent=11 // pred_check_branch
          %262 = sbr.rel (%p260) target = $region36
        $region35: #{tpu_custom_call.1} parent=11 // pred_region
          _
        $region36: #{tpu_custom_call.1} parent=11 // pred_fallthru
          _
      $region12: #{tpu_custom_call.1} parent=5 // pred_fallthru
        _
      %p263 = scmp.lt.s32.totalorder %s14, 4
      // Predicated region
      $region37: #{tpu_custom_call.1} parent=5 // pred_check
        %p264 = pneg %p263
      $region38: #{tpu_custom_call.1} parent=5 // pred_check_branch
        %266 = sbr.rel (%p264) target = $region40
      $region39: #{tpu_custom_call.1} parent=5 // pred_region
        // Predicated region
        $region41: #{tpu_custom_call.1} parent=39 // pred_check
          %p267 = pneg %p59
        $region42: #{tpu_custom_call.1} parent=39 // pred_check_branch
          %269 = sbr.rel (%p267) target = $region44
        $region43: #{tpu_custom_call.1} parent=39 // pred_region
          %s270 = smul.u32 %s22, 2
          %s271 = sadd.s32 %s270, %s23
          %s272 = smul.u32 2, %s271
          %p273 = scmp.lt.s32.totalorder %s21, 1
          %s274 = scalar_select %p273, %s21, 1
          %p275 = scmp.lt.s32.totalorder %s272, 3
          %s276 = scalar_select %p275, %s272, 3
          %s277 = smul.addr %s274, 4
          %s278 = sadd.s32 %s276, %s277
          %s279 = smul.addr %s278, 4
          %s280 = scalar_lea.vmem %s0, %s279
          %s281 = smul.u32 %s22, 2
          %s282 = sadd.s32 %s281, %s23
          %s283 = smul.u32 2, %s282
        $region44: #{tpu_custom_call.1} parent=39 // pred_fallthru
          _
      $region40: #{tpu_custom_call.1} parent=5 // pred_fallthru
        _
      %p284 = scmp.le.s32.totalorder 1, %s14
      %p285 = scmp.lt.s32.totalorder %s14, 5
      %p286 = pnand %p284, %p285
      %p287 = pneg %p286
      // Predicated region
      $region45: #{tpu_custom_call.1} parent=5 // pred_check
        _
      $region46: #{tpu_custom_call.1} parent=5 // pred_check_branch
        %289 = sbr.rel (%p286) target = $region48
      $region47: #{tpu_custom_call.1} parent=5 // pred_region
        %s290 = ssub.s32 %s14, 1
        // Predicated region
        $region49: #{tpu_custom_call.1} parent=47 // pred_check
          %p291 = pneg %p170
        $region50: #{tpu_custom_call.1} parent=47 // pred_check_branch
          %293 = sbr.rel (%p291) target = $region52
        $region51: #{tpu_custom_call.1} parent=47 // pred_region
          %295 = dma.done [#allocation4], 8192
        $region52: #{tpu_custom_call.1} parent=47 // pred_fallthru
          _
        %s296 = smul.u32 %s25, 2
        %s297 = sadd.s32 %s296, %s26
        %s298 = smul.u32 2, %s297
        %p299 = scmp.lt.s32.totalorder %s24, 1
        %s300 = scalar_select %p299, %s24, 1
        %p301 = scmp.lt.s32.totalorder %s298, 3
        %s302 = scalar_select %p301, %s298, 3
        %s303 = smul.addr %s300, 4
        %s304 = sadd.s32 %s302, %s303
        %s305 = smul.addr %s304, 4
        %s306 = scalar_lea.vmem %s0, %s305
        %p307 = pneg %p65
        %p308 = pneg %p62
        %p309 = pneg %p86
        %p310 = pneg %p83
        %p311 = pneg %p107
        %p312 = pneg %p104
        %p313 = pneg %p128
        %p314 = pneg %p125
        %p315 = pneg %p149
        %p316 = pneg %p146
        %p317 = pneg %p170
        %p318 = pneg %p167
        %p319 = pneg %p191
        %p320 = pneg %p188
        %p321 = pneg %p219
        %p322 = pneg %p216
        %p323 = scmp.lt.s32.totalorder %s24, 1
        %s324 = scalar_select %p323, %s24, 1
        %p325 = scmp.lt.s32.totalorder %s25, 0
        %s326 = scalar_select %p325, %s25, 0
        %s327 = smul.addr %s326, 8
        %s328 = smul.addr %s324, 8
        %s329 = sadd.s32 %s327, %s328
        %s330 = scalar_lea.vmem %s7, %s329
        %s331 = smul.u32 %s25, 2
        %s332 = sadd.s32 %s331, %s26
        %s333 = smul.u32 2, %s332
        %p334 = scmp.lt.s32.totalorder %s24, 1
        %s335 = scalar_select %p334, %s24, 1
        %p336 = scmp.lt.s32.totalorder %s333, 3
        %s337 = scalar_select %p336, %s333, 3
        %s338 = smul.addr %s335, 4
        %s339 = sadd.s32 %s337, %s338
        %s340 = smul.addr %s339, 4
        %s341 = scalar_lea.vmem %s0, %s340
        %s342 = smul.u32 %s25, 2
        %s343 = sadd.s32 %s342, %s26
        %s344 = smul.u32 2, %s343
        %p345 = scmp.lt.s32.totalorder %s24, 1
        %s346 = scalar_select %p345, %s24, 1
        %p347 = scmp.lt.s32.totalorder %s25, 0
        %s348 = scalar_select %p347, %s25, 0
        %s349 = smul.addr %s348, 8
        %s350 = smul.addr %s346, 8
        %s351 = sadd.s32 %s349, %s350
        %s352 = scalar_lea.vmem %s7, %s351
        %p354 = scmp.eq.s32.totalorder %s26, 0
        // Predicated region
        $region53: #{tpu_custom_call.1} parent=47 // pred_check
          %p355 = pneg %p354
        $region54: #{tpu_custom_call.1} parent=47 // pred_check_branch
          %357 = sbr.rel (%p355) target = $region56
        $region55: #{tpu_custom_call.1} parent=47 // pred_region
          %358 = vst [vmem:[#allocation2] sm:$0xff] -inf
        $region56: #{tpu_custom_call.1} parent=47 // pred_fallthru
          _
        %v359 = vld [vmem:[%s341] sm:$0x77]
        %v360 = vld [vmem:[%s1] sm:$0xff]
        %v361 = vld [vmem:[%s1 + $0x8] sm:$0xff]
        %v362 = vld [vmem:[%s1 + $0x10] sm:$0xff]
        %v363 = vld [vmem:[%s1 + $0x18] sm:$0xff]
        %v364 = vld [vmem:[%s1 + $0x20] sm:$0xff]
        %v365 = vld [vmem:[%s1 + $0x28] sm:$0xff]
        %v366 = vld [vmem:[%s1 + $0x30] sm:$0xff]
        %v367 = vld [vmem:[%s1 + $0x38] sm:$0xff]
        %369 = vset.pattern.permute.xlu0 0
        %370 = vperm.xlu0 %369, %v360
        %v371 = vpop.permute.xlu0 %370
        %374 = vset.pattern.permute.xlu0 0
        %375 = vperm.xlu0 %374, %v361
        %v376 = vpop.permute.xlu0 %375
        %379 = vset.pattern.permute.xlu0 0
        %380 = vperm.xlu0 %379, %v362
        %v381 = vpop.permute.xlu0 %380
        %384 = vset.pattern.permute.xlu0 0
        %385 = vperm.xlu0 %384, %v363
        %v386 = vpop.permute.xlu0 %385
        %389 = vset.pattern.permute.xlu0 0
        %390 = vperm.xlu0 %389, %v364
        %v391 = vpop.permute.xlu0 %390
        %394 = vset.pattern.permute.xlu0 0
        %395 = vperm.xlu0 %394, %v365
        %v396 = vpop.permute.xlu0 %395
        %399 = vset.pattern.permute.xlu0 0
        %400 = vperm.xlu0 %399, %v366
        %v401 = vpop.permute.xlu0 %400
        %404 = vset.pattern.permute.xlu0 0
        %405 = vperm.xlu0 %404, %v367
        %v406 = vpop.permute.xlu0 %405
        %v409 = vperm.slane %v359, 0
        %v410 = vperm.slane %v359, 4
        %v413 = vperm.slane %v409, 0
        %v414 = vperm.slane %v410, 0
        %v415 = vmul.f32 %v371, %v413
        %v416 = vmul.f32 %v371, %v414
        %v417 = vmul.f32 %v376, %v413
        %v418 = vmul.f32 %v376, %v414
        %v419 = vmul.f32 %v381, %v413
        %v420 = vmul.f32 %v381, %v414
        %v421 = vmul.f32 %v386, %v413
        %v422 = vmul.f32 %v386, %v414
        %v423 = vmul.f32 %v391, %v413
        %v424 = vmul.f32 %v391, %v414
        %v425 = vmul.f32 %v396, %v413
        %v426 = vmul.f32 %v396, %v414
        %v427 = vmul.f32 %v401, %v413
        %v428 = vmul.f32 %v401, %v414
        %v429 = vmul.f32 %v406, %v413
        %v430 = vmul.f32 %v406, %v414
        %431 = vset.pattern.permute.xlu0 1
        %432 = vperm.xlu0 %431, %v360
        %v433 = vpop.permute.xlu0 %432
        %435 = vset.pattern.permute.xlu0 1
        %436 = vperm.xlu0 %435, %v361
        %v437 = vpop.permute.xlu0 %436
        %439 = vset.pattern.permute.xlu0 1
        %440 = vperm.xlu0 %439, %v362
        %v441 = vpop.permute.xlu0 %440
        %443 = vset.pattern.permute.xlu0 1
        %444 = vperm.xlu0 %443, %v363
        %v445 = vpop.permute.xlu0 %444
        %447 = vset.pattern.permute.xlu0 1
        %448 = vperm.xlu0 %447, %v364
        %v449 = vpop.permute.xlu0 %448
        %451 = vset.pattern.permute.xlu0 1
        %452 = vperm.xlu0 %451, %v365
        %v453 = vpop.permute.xlu0 %452
        %455 = vset.pattern.permute.xlu0 1
        %456 = vperm.xlu0 %455, %v366
        %v457 = vpop.permute.xlu0 %456
        %459 = vset.pattern.permute.xlu0 1
        %460 = vperm.xlu0 %459, %v367
        %v461 = vpop.permute.xlu0 %460
        %v463 = vperm.slane %v359, 1
        %v464 = vperm.slane %v359, 5
        %v467 = vperm.slane %v463, 1
        %v468 = vperm.slane %v464, 1
        %v469 = vmul.f32 %v433, %v467
        %v470 = vmul.f32 %v433, %v468
        %v471 = vmul.f32 %v437, %v467
        %v472 = vmul.f32 %v437, %v468
        %v473 = vmul.f32 %v441, %v467
        %v474 = vmul.f32 %v441, %v468
        %v475 = vmul.f32 %v445, %v467
        %v476 = vmul.f32 %v445, %v468
        %v477 = vmul.f32 %v449, %v467
        %v478 = vmul.f32 %v449, %v468
        %v479 = vmul.f32 %v453, %v467
        %v480 = vmul.f32 %v453, %v468
        %v481 = vmul.f32 %v457, %v467
        %v482 = vmul.f32 %v457, %v468
        %v483 = vmul.f32 %v461, %v467
        %v484 = vmul.f32 %v461, %v468
        %v485 = vadd.f32 %v415, %v469
        %v486 = vadd.f32 %v416, %v470
        %v487 = vadd.f32 %v417, %v471
        %v488 = vadd.f32 %v418, %v472
        %v489 = vadd.f32 %v419, %v473
        %v490 = vadd.f32 %v420, %v474
        %v491 = vadd.f32 %v421, %v475
        %v492 = vadd.f32 %v422, %v476
        %v493 = vadd.f32 %v423, %v477
        %v494 = vadd.f32 %v424, %v478
        %v495 = vadd.f32 %v425, %v479
        %v496 = vadd.f32 %v426, %v480
        %v497 = vadd.f32 %v427, %v481
        %v498 = vadd.f32 %v428, %v482
        %v499 = vadd.f32 %v429, %v483
        %v500 = vadd.f32 %v430, %v484
        %501 = vset.pattern.permute.xlu0 2
        %502 = vperm.xlu0 %501, %v360
        %v503 = vpop.permute.xlu0 %502
        %505 = vset.pattern.permute.xlu0 2
        %506 = vperm.xlu0 %505, %v361
        %v507 = vpop.permute.xlu0 %506
        %509 = vset.pattern.permute.xlu0 2
        %510 = vperm.xlu0 %509, %v362
        %v511 = vpop.permute.xlu0 %510
        %513 = vset.pattern.permute.xlu0 2
        %514 = vperm.xlu0 %513, %v363
        %v515 = vpop.permute.xlu0 %514
        %517 = vset.pattern.permute.xlu0 2
        %518 = vperm.xlu0 %517, %v364
        %v519 = vpop.permute.xlu0 %518
        %521 = vset.pattern.permute.xlu0 2
        %522 = vperm.xlu0 %521, %v365
        %v523 = vpop.permute.xlu0 %522
        %525 = vset.pattern.permute.xlu0 2
        %526 = vperm.xlu0 %525, %v366
        %v527 = vpop.permute.xlu0 %526
        %529 = vset.pattern.permute.xlu0 2
        %530 = vperm.xlu0 %529, %v367
        %v531 = vpop.permute.xlu0 %530
        %v533 = vperm.slane %v359, 2
        %v534 = vperm.slane %v359, 6
        %v537 = vperm.slane %v533, 2
        %v538 = vperm.slane %v534, 2
        %v539 = vmul.f32 %v503, %v537
        %v540 = vmul.f32 %v503, %v538
        %v541 = vmul.f32 %v507, %v537
        %v542 = vmul.f32 %v507, %v538
        %v543 = vmul.f32 %v511, %v537
        %v544 = vmul.f32 %v511, %v538
        %v545 = vmul.f32 %v515, %v537
        %v546 = vmul.f32 %v515, %v538
        %v547 = vmul.f32 %v519, %v537
        %v548 = vmul.f32 %v519, %v538
        %v549 = vmul.f32 %v523, %v537
        %v550 = vmul.f32 %v523, %v538
        %v551 = vmul.f32 %v527, %v537
        %v552 = vmul.f32 %v527, %v538
        %v553 = vmul.f32 %v531, %v537
        %v554 = vmul.f32 %v531, %v538
        %v555 = vadd.f32 %v485, %v539
        %v556 = vadd.f32 %v486, %v540
        %v557 = vadd.f32 %v487, %v541
        %v558 = vadd.f32 %v488, %v542
        %v559 = vadd.f32 %v489, %v543
        %v560 = vadd.f32 %v490, %v544
        %v561 = vadd.f32 %v491, %v545
        %v562 = vadd.f32 %v492, %v546
        %v563 = vadd.f32 %v493, %v547
        %v564 = vadd.f32 %v494, %v548
        %v565 = vadd.f32 %v495, %v549
        %v566 = vadd.f32 %v496, %v550
        %v567 = vadd.f32 %v497, %v551
        %v568 = vadd.f32 %v498, %v552
        %v569 = vadd.f32 %v499, %v553
        %v570 = vadd.f32 %v500, %v554
        %v571 = vld [vmem:[%s2] sm:$0xff]
        %v572 = vld [vmem:[%s2 + $0x8] sm:$0xff]
        %v573 = vld [vmem:[%s2 + $0x10] sm:$0xff]
        %v574 = vld [vmem:[%s2 + $0x18] sm:$0xff]
        %v575 = vld [vmem:[%s2 + $0x20] sm:$0xff]
        %v576 = vld [vmem:[%s2 + $0x28] sm:$0xff]
        %v577 = vld [vmem:[%s2 + $0x30] sm:$0xff]
        %v578 = vld [vmem:[%s2 + $0x38] sm:$0xff]
        %580 = vset.pattern.permute.xlu0 0
        %581 = vperm.xlu0 %580, %v571
        %v582 = vpop.permute.xlu0 %581
        %585 = vset.pattern.permute.xlu0 0
        %586 = vperm.xlu0 %585, %v572
        %v587 = vpop.permute.xlu0 %586
        %590 = vset.pattern.permute.xlu0 0
        %591 = vperm.xlu0 %590, %v573
        %v592 = vpop.permute.xlu0 %591
        %595 = vset.pattern.permute.xlu0 0
        %596 = vperm.xlu0 %595, %v574
        %v597 = vpop.permute.xlu0 %596
        %600 = vset.pattern.permute.xlu0 0
        %601 = vperm.xlu0 %600, %v575
        %v602 = vpop.permute.xlu0 %601
        %605 = vset.pattern.permute.xlu0 0
        %606 = vperm.xlu0 %605, %v576
        %v607 = vpop.permute.xlu0 %606
        %610 = vset.pattern.permute.xlu0 0
        %611 = vperm.xlu0 %610, %v577
        %v612 = vpop.permute.xlu0 %611
        %615 = vset.pattern.permute.xlu0 0
        %616 = vperm.xlu0 %615, %v578
        %v617 = vpop.permute.xlu0 %616
        %v619 = vadd.f32 %v555, %v582
        %v620 = vadd.f32 %v556, %v582
        %v621 = vadd.f32 %v557, %v587
        %v622 = vadd.f32 %v558, %v587
        %v623 = vadd.f32 %v559, %v592
        %v624 = vadd.f32 %v560, %v592
        %v625 = vadd.f32 %v561, %v597
        %v626 = vadd.f32 %v562, %v597
        %v627 = vadd.f32 %v563, %v602
        %v628 = vadd.f32 %v564, %v602
        %v629 = vadd.f32 %v565, %v607
        %v630 = vadd.f32 %v566, %v607
        %v631 = vadd.f32 %v567, %v612
        %v632 = vadd.f32 %v568, %v612
        %v633 = vadd.f32 %v569, %v617
        %v634 = vadd.f32 %v570, %v617
        %v635 = vmax.f32 %v619, 0.0
        %v636 = vmax.f32 %v620, 0.0
        %v637 = vmax.f32 %v621, 0.0
        %v638 = vmax.f32 %v622, 0.0
        %v639 = vmax.f32 %v623, 0.0
        %v640 = vmax.f32 %v624, 0.0
        %v641 = vmax.f32 %v625, 0.0
        %v642 = vmax.f32 %v626, 0.0
        %v643 = vmax.f32 %v627, 0.0
        %v644 = vmax.f32 %v628, 0.0
        %v645 = vmax.f32 %v629, 0.0
        %v646 = vmax.f32 %v630, 0.0
        %v647 = vmax.f32 %v631, 0.0
        %v648 = vmax.f32 %v632, 0.0
        %v649 = vmax.f32 %v633, 0.0
        %v650 = vmax.f32 %v634, 0.0
        %v651 = vpack.c.bf16 %v637, %v635
        %v652 = vpack.c.bf16 %v638, %v636
        %v653 = vpack.c.bf16 %v641, %v639
        %v654 = vpack.c.bf16 %v642, %v640
        %v655 = vpack.c.bf16 %v645, %v643
        %v656 = vpack.c.bf16 %v646, %v644
        %v657 = vpack.c.bf16 %v649, %v647
        %v658 = vpack.c.bf16 %v650, %v648
        %659 = vxpose.binary.xlu0.c.b16.start [1/16] %v652, %v651, 128
        %660 = vxpose.binary.xlu0.c.b16.cont [2/16] %v654, %v653, 128
        %661 = vxpose.binary.xlu0.c.b16.cont [3/16] %v656, %v655, 128
        %662 = vxpose.binary.xlu0.c.b16.cont [4/16] %v658, %v657, 128
        %663 = vxpose.binary.xlu0.c.b16.cont [5/16] 0, 0, 128
        %664 = vxpose.binary.xlu0.c.b16.cont [6/16] 0, 0, 128
        %665 = vxpose.binary.xlu0.c.b16.cont [7/16] 0, 0, 128
        %666 = vxpose.binary.xlu0.c.b16.end [8/16] 0, 0, 128
        %v667 = vpop.trf.xlu0
        %v668 = vpop.trf.xlu0
        %v669 = vpop.trf.xlu0
        %v670 = vpop.trf.xlu0
        %v671 = vpop.trf.xlu0
        %v672 = vpop.trf.xlu0
        %v673 = vpop.trf.xlu0
        %v674 = vpop.trf.xlu0
        %v675 = vpop.trf.xlu0
        %v676 = vpop.trf.xlu0
        %v677 = vpop.trf.xlu0
        %v678 = vpop.trf.xlu0
        %v679 = vpop.trf.xlu0
        %v680 = vpop.trf.xlu0
        %v681 = vpop.trf.xlu0
        %v682 = vpop.trf.xlu0
        %v683 = vld [vmem:[%s3] sm:$0xf]
        %v684 = vld [vmem:[%s3 + $0x4] sm:$0xf]
        %v685 = vld [vmem:[%s3 + $0x8] sm:$0xf]
        %v686 = vld [vmem:[%s3 + $0xc] sm:$0xf]
        %v687 = vld [vmem:[%s3 + $0x10] sm:$0xf]
        %v688 = vld [vmem:[%s3 + $0x14] sm:$0xf]
        %v689 = vld [vmem:[%s3 + $0x18] sm:$0xf]
        %v690 = vld [vmem:[%s3 + $0x1c] sm:$0xf]
        %v691 = vld [vmem:[%s4] sm:$0x1]
        %v693 = vperm.slane %v691, 0
        %v703 = vunpack.c.l.b16 %v683
        %v704 = vunpack.c.l.b16 %v684
        %v705 = vunpack.c.l.b16 %v685
        %v706 = vunpack.c.l.b16 %v686
        %v707 = vunpack.c.l.b16 %v687
        %v708 = vunpack.c.l.b16 %v688
        %v709 = vunpack.c.l.b16 %v689
        %v710 = vunpack.c.l.b16 %v690
        %v711 = vpack.c.b16 %v704, %v703
        %v712 = vpack.c.b16 %v706, %v705
        %v713 = vpack.c.b16 %v708, %v707
        %v714 = vpack.c.b16 %v710, %v709
        %vm719 = vcmask 523264
        %v721 = vsel %vm719, %v667, 0
        %v724 = vsel %vm719, %v669, 0
        %v727 = vsel %vm719, %v671, 0
        %v730 = vsel %vm719, %v673, 0
        %v733 = vsel %vm719, %v675, 0
        %v736 = vsel %vm719, %v677, 0
        %v739 = vsel %vm719, %v679, 0
        %v742 = vsel %vm719, %v681, 0
        %v745 = vsel %vm719, %v668, 0
        %v748 = vsel %vm719, %v670, 0
        %v751 = vsel %vm719, %v672, 0
        %v754 = vsel %vm719, %v674, 0
        %v757 = vsel %vm719, %v676, 0
        %v760 = vsel %vm719, %v678, 0
        %v763 = vsel %vm719, %v680, 0
        %v766 = vsel %vm719, %v682, 0
        %768 = vmatpush.bf16.msra.mxu0 0
        %769 = vmatpush.bf16.msra.mxu0 0
        %770 = vmatpush.bf16.msra.mxu0 0
        %771 = vmatpush.bf16.msra.mxu0 0
        %772 = vmatpush.bf16.msra.mxu0 %v714
        %773 = vmatpush.bf16.msra.mxu0 %v713
        %774 = vmatpush.bf16.msra.mxu0 %v712
        %775 = vmatpush.bf16.msra.mxu0 %v711
        %776 = vmatmul.bf16.gmra.mxu0 %v721
        %v777 = vpop.f32.mrf.mxu0
        %v778 = vadd.f32 %v693, %v777
        %v779 = vpop.f32.mrf.mxu0
        %v780 = vadd.f32 %v693, %v779
        %781 = vmatmul.bf16.gmra.mxu0 %v724
        %v782 = vpop.f32.mrf.mxu0
        %v783 = vadd.f32 %v693, %v782
        %v784 = vpop.f32.mrf.mxu0
        %v785 = vadd.f32 %v693, %v784
        %786 = vmatmul.bf16.gmra.mxu0 %v727
        %v787 = vpop.f32.mrf.mxu0
        %v788 = vadd.f32 %v693, %v787
        %v789 = vpop.f32.mrf.mxu0
        %v790 = vadd.f32 %v693, %v789
        %791 = vmatmul.bf16.gmra.mxu0 %v730
        %v792 = vpop.f32.mrf.mxu0
        %v793 = vadd.f32 %v693, %v792
        %v794 = vpop.f32.mrf.mxu0
        %v795 = vadd.f32 %v693, %v794
        %796 = vmatmul.bf16.gmra.mxu0 %v733
        %v797 = vpop.f32.mrf.mxu0
        %v798 = vadd.f32 %v693, %v797
        %v799 = vpop.f32.mrf.mxu0
        %v800 = vadd.f32 %v693, %v799
        %801 = vmatmul.bf16.gmra.mxu0 %v736
        %v802 = vpop.f32.mrf.mxu0
        %v803 = vadd.f32 %v693, %v802
        %v804 = vpop.f32.mrf.mxu0
        %v805 = vadd.f32 %v693, %v804
        %806 = vmatmul.bf16.gmra.mxu0 %v739
        %v807 = vpop.f32.mrf.mxu0
        %v808 = vadd.f32 %v693, %v807
        %v809 = vpop.f32.mrf.mxu0
        %v810 = vadd.f32 %v693, %v809
        %811 = vmatmul.bf16.gmra.mxu0 %v742
        %v812 = vpop.f32.mrf.mxu0
        %v813 = vadd.f32 %v693, %v812
        %v814 = vpop.f32.mrf.mxu0
        %v815 = vadd.f32 %v693, %v814
        %816 = vmatmul.bf16.gmra.mxu0 %v745
        %v817 = vpop.f32.mrf.mxu0
        %v818 = vadd.f32 %v693, %v817
        %v819 = vpop.f32.mrf.mxu0
        %v820 = vadd.f32 %v693, %v819
        %821 = vmatmul.bf16.gmra.mxu0 %v748
        %v822 = vpop.f32.mrf.mxu0
        %v823 = vadd.f32 %v693, %v822
        %v824 = vpop.f32.mrf.mxu0
        %v825 = vadd.f32 %v693, %v824
        %826 = vmatmul.bf16.gmra.mxu0 %v751
        %v827 = vpop.f32.mrf.mxu0
        %v828 = vadd.f32 %v693, %v827
        %v829 = vpop.f32.mrf.mxu0
        %v830 = vadd.f32 %v693, %v829
        %831 = vmatmul.bf16.gmra.mxu0 %v754
        %v832 = vpop.f32.mrf.mxu0
        %v833 = vadd.f32 %v693, %v832
        %v834 = vpop.f32.mrf.mxu0
        %v835 = vadd.f32 %v693, %v834
        %836 = vmatmul.bf16.gmra.mxu0 %v757
        %v837 = vpop.f32.mrf.mxu0
        %v838 = vadd.f32 %v693, %v837
        %v839 = vpop.f32.mrf.mxu0
        %v840 = vadd.f32 %v693, %v839
        %841 = vmatmul.bf16.gmra.mxu0 %v760
        %v842 = vpop.f32.mrf.mxu0
        %v843 = vadd.f32 %v693, %v842
        %v844 = vpop.f32.mrf.mxu0
        %v845 = vadd.f32 %v693, %v844
        %846 = vmatmul.bf16.gmra.mxu0 %v763
        %v847 = vpop.f32.mrf.mxu0
        %v848 = vadd.f32 %v693, %v847
        %v849 = vpop.f32.mrf.mxu0
        %v850 = vadd.f32 %v693, %v849
        %851 = vmatmul.bf16.gmra.mxu0 %v766
        %v852 = vpop.f32.mrf.mxu0
        %v853 = vadd.f32 %v693, %v852
        %v854 = vpop.f32.mrf.mxu0
        %v855 = vadd.f32 %v693, %v854
        %856 = vdwg.mxu0
        %v857 = vmax.f32 %v778, 0.0
        %v858 = vmax.f32 %v780, 0.0
        %v859 = vmax.f32 %v783, 0.0
        %v860 = vmax.f32 %v785, 0.0
        %v861 = vmax.f32 %v788, 0.0
        %v862 = vmax.f32 %v790, 0.0
        %v863 = vmax.f32 %v793, 0.0
        %v864 = vmax.f32 %v795, 0.0
        %v865 = vmax.f32 %v798, 0.0
        %v866 = vmax.f32 %v800, 0.0
        %v867 = vmax.f32 %v803, 0.0
        %v868 = vmax.f32 %v805, 0.0
        %v869 = vmax.f32 %v808, 0.0
        %v870 = vmax.f32 %v810, 0.0
        %v871 = vmax.f32 %v813, 0.0
        %v872 = vmax.f32 %v815, 0.0
        %v873 = vmax.f32 %v818, 0.0
        %v874 = vmax.f32 %v820, 0.0
        %v875 = vmax.f32 %v823, 0.0
        %v876 = vmax.f32 %v825, 0.0
        %v877 = vmax.f32 %v828, 0.0
        %v878 = vmax.f32 %v830, 0.0
        %v879 = vmax.f32 %v833, 0.0
        %v880 = vmax.f32 %v835, 0.0
        %v881 = vmax.f32 %v838, 0.0
        %v882 = vmax.f32 %v840, 0.0
        %v883 = vmax.f32 %v843, 0.0
        %v884 = vmax.f32 %v845, 0.0
        %v885 = vmax.f32 %v848, 0.0
        %v886 = vmax.f32 %v850, 0.0
        %v887 = vmax.f32 %v853, 0.0
        %v888 = vmax.f32 %v855, 0.0
        %v889 = vpack.c.bf16 %v858, %v857
        %v890 = vpack.c.bf16 %v860, %v859
        %v891 = vpack.c.bf16 %v862, %v861
        %v892 = vpack.c.bf16 %v864, %v863
        %v893 = vpack.c.bf16 %v866, %v865
        %v894 = vpack.c.bf16 %v868, %v867
        %v895 = vpack.c.bf16 %v870, %v869
        %v896 = vpack.c.bf16 %v872, %v871
        %v897 = vpack.c.bf16 %v874, %v873
        %v898 = vpack.c.bf16 %v876, %v875
        %v899 = vpack.c.bf16 %v878, %v877
        %v900 = vpack.c.bf16 %v880, %v879
        %v901 = vpack.c.bf16 %v882, %v881
        %v902 = vpack.c.bf16 %v884, %v883
        %v903 = vpack.c.bf16 %v886, %v885
        %v904 = vpack.c.bf16 %v888, %v887
        %v905 = vld [vmem:[#allocation3] sm:$0xff]
        %v906 = vld [vmem:[#allocation3 + $0x8] sm:$0xff]
        %v907 = vld [vmem:[#allocation3 + $0x10] sm:$0xff]
        %v908 = vld [vmem:[#allocation3 + $0x18] sm:$0xff]
        %v909 = vld [vmem:[#allocation3 + $0x20] sm:$0xff]
        %v910 = vld [vmem:[#allocation3 + $0x28] sm:$0xff]
        %v911 = vld [vmem:[#allocation3 + $0x30] sm:$0xff]
        %v912 = vld [vmem:[#allocation3 + $0x38] sm:$0xff]
        %v913 = vld [vmem:[#allocation3 + $0x40] sm:$0xff]
        %v914 = vld [vmem:[#allocation3 + $0x48] sm:$0xff]
        %v915 = vld [vmem:[#allocation3 + $0x50] sm:$0xff]
        %v916 = vld [vmem:[#allocation3 + $0x58] sm:$0xff]
        %v917 = vld [vmem:[#allocation3 + $0x60] sm:$0xff]
        %v918 = vld [vmem:[#allocation3 + $0x68] sm:$0xff]
        %v919 = vld [vmem:[#allocation3 + $0x70] sm:$0xff]
        %v920 = vld [vmem:[#allocation3 + $0x78] sm:$0xff]
        %v921 = vld [vmem:[#allocation3 + $0x80] sm:$0xff]
        %v922 = vld [vmem:[#allocation3 + $0x88] sm:$0xff]
        %v923 = vld [vmem:[#allocation3 + $0x90] sm:$0xff]
        %v924 = vld [vmem:[#allocation3 + $0x98] sm:$0xff]
        %v925 = vld [vmem:[#allocation3 + $0xa0] sm:$0xff]
        %v926 = vld [vmem:[#allocation3 + $0xa8] sm:$0xff]
        %v927 = vld [vmem:[#allocation3 + $0xb0] sm:$0xff]
        %v928 = vld [vmem:[#allocation3 + $0xb8] sm:$0xff]
        %v929 = vld [vmem:[#allocation3 + $0xc0] sm:$0xff]
        %v930 = vld [vmem:[#allocation3 + $0xc8] sm:$0xff]
        %v931 = vld [vmem:[#allocation3 + $0xd0] sm:$0xff]
        %v932 = vld [vmem:[#allocation3 + $0xd8] sm:$0xff]
        %v933 = vld [vmem:[#allocation3 + $0xe0] sm:$0xff]
        %v934 = vld [vmem:[#allocation3 + $0xe8] sm:$0xff]
        %v935 = vld [vmem:[#allocation3 + $0xf0] sm:$0xff]
        %v936 = vld [vmem:[#allocation3 + $0xf8] sm:$0xff]
        %v937 = vld [vmem:[#allocation3 + $0x100] sm:$0xff]
        %v938 = vld [vmem:[#allocation3 + $0x108] sm:$0xff]
        %v939 = vld [vmem:[#allocation3 + $0x110] sm:$0xff]
        %v940 = vld [vmem:[#allocation3 + $0x118] sm:$0xff]
        %v941 = vld [vmem:[#allocation3 + $0x120] sm:$0xff]
        %v942 = vld [vmem:[#allocation3 + $0x128] sm:$0xff]
        %v943 = vld [vmem:[#allocation3 + $0x130] sm:$0xff]
        %v944 = vld [vmem:[#allocation3 + $0x138] sm:$0xff]
        %v945 = vld [vmem:[#allocation3 + $0x140] sm:$0xff]
        %v946 = vld [vmem:[#allocation3 + $0x148] sm:$0xff]
        %v947 = vld [vmem:[#allocation3 + $0x150] sm:$0xff]
        %v948 = vld [vmem:[#allocation3 + $0x158] sm:$0xff]
        %v949 = vld [vmem:[#allocation3 + $0x160] sm:$0xff]
        %v950 = vld [vmem:[#allocation3 + $0x168] sm:$0xff]
        %v951 = vld [vmem:[#allocation3 + $0x170] sm:$0xff]
        %v952 = vld [vmem:[#allocation3 + $0x178] sm:$0xff]
        %v953 = vld [vmem:[#allocation3 + $0x180] sm:$0xff]
        %v954 = vld [vmem:[#allocation3 + $0x188] sm:$0xff]
        %v955 = vld [vmem:[#allocation3 + $0x190] sm:$0xff]
        %v956 = vld [vmem:[#allocation3 + $0x198] sm:$0xff]
        %v957 = vld [vmem:[#allocation3 + $0x1a0] sm:$0xff]
        %v958 = vld [vmem:[#allocation3 + $0x1a8] sm:$0xff]
        %v959 = vld [vmem:[#allocation3 + $0x1b0] sm:$0xff]
        %v960 = vld [vmem:[#allocation3 + $0x1b8] sm:$0xff]
        %v961 = vld [vmem:[#allocation3 + $0x1c0] sm:$0xff]
        %v962 = vld [vmem:[#allocation3 + $0x1c8] sm:$0xff]
        %v963 = vld [vmem:[#allocation3 + $0x1d0] sm:$0xff]
        %v964 = vld [vmem:[#allocation3 + $0x1d8] sm:$0xff]
        %v965 = vld [vmem:[#allocation3 + $0x1e0] sm:$0xff]
        %v966 = vld [vmem:[#allocation3 + $0x1e8] sm:$0xff]
        %v967 = vld [vmem:[#allocation3 + $0x1f0] sm:$0xff]
        %v968 = vld [vmem:[#allocation3 + $0x1f8] sm:$0xff]
        %v1033 = vunpack.c.l.b16 %v905
        %v1034 = vunpack.c.h.b16 %v905
        %v1035 = vunpack.c.l.b16 %v906
        %v1036 = vunpack.c.h.b16 %v906
        %v1037 = vunpack.c.l.b16 %v907
        %v1038 = vunpack.c.h.b16 %v907
        %v1039 = vunpack.c.l.b16 %v908
        %v1040 = vunpack.c.h.b16 %v908
        %v1041 = vunpack.c.l.b16 %v909
        %v1042 = vunpack.c.h.b16 %v909
        %v1043 = vunpack.c.l.b16 %v910
        %v1044 = vunpack.c.h.b16 %v910
        %v1045 = vunpack.c.l.b16 %v911
        %v1046 = vunpack.c.h.b16 %v911
        %v1047 = vunpack.c.l.b16 %v912
        %v1048 = vunpack.c.h.b16 %v912
        %v1049 = vunpack.c.l.b16 %v913
        %v1050 = vunpack.c.h.b16 %v913
        %v1051 = vunpack.c.l.b16 %v914
        %v1052 = vunpack.c.h.b16 %v914
        %v1053 = vunpack.c.l.b16 %v915
        %v1054 = vunpack.c.h.b16 %v915
        %v1055 = vunpack.c.l.b16 %v916
        %v1056 = vunpack.c.h.b16 %v916
        %v1057 = vunpack.c.l.b16 %v917
        %v1058 = vunpack.c.h.b16 %v917
        %v1059 = vunpack.c.l.b16 %v918
        %v1060 = vunpack.c.h.b16 %v918
        %v1061 = vunpack.c.l.b16 %v919
        %v1062 = vunpack.c.h.b16 %v919
        %v1063 = vunpack.c.l.b16 %v920
        %v1064 = vunpack.c.h.b16 %v920
        %v1065 = vunpack.c.l.b16 %v921
        %v1066 = vunpack.c.h.b16 %v921
        %v1067 = vunpack.c.l.b16 %v922
        %v1068 = vunpack.c.h.b16 %v922
        %v1069 = vunpack.c.l.b16 %v923
        %v1070 = vunpack.c.h.b16 %v923
        %v1071 = vunpack.c.l.b16 %v924
        %v1072 = vunpack.c.h.b16 %v924
        %v1073 = vunpack.c.l.b16 %v925
        %v1074 = vunpack.c.h.b16 %v925
        %v1075 = vunpack.c.l.b16 %v926
        %v1076 = vunpack.c.h.b16 %v926
        %v1077 = vunpack.c.l.b16 %v927
        %v1078 = vunpack.c.h.b16 %v927
        %v1079 = vunpack.c.l.b16 %v928
        %v1080 = vunpack.c.h.b16 %v928
        %v1081 = vunpack.c.l.b16 %v929
        %v1082 = vunpack.c.h.b16 %v929
        %v1083 = vunpack.c.l.b16 %v930
        %v1084 = vunpack.c.h.b16 %v930
        %v1085 = vunpack.c.l.b16 %v931
        %v1086 = vunpack.c.h.b16 %v931
        %v1087 = vunpack.c.l.b16 %v932
        %v1088 = vunpack.c.h.b16 %v932
        %v1089 = vunpack.c.l.b16 %v933
        %v1090 = vunpack.c.h.b16 %v933
        %v1091 = vunpack.c.l.b16 %v934
        %v1092 = vunpack.c.h.b16 %v934
        %v1093 = vunpack.c.l.b16 %v935
        %v1094 = vunpack.c.h.b16 %v935
        %v1095 = vunpack.c.l.b16 %v936
        %v1096 = vunpack.c.h.b16 %v936
        %v1097 = vunpack.c.l.b16 %v937
        %v1098 = vunpack.c.h.b16 %v937
        %v1099 = vunpack.c.l.b16 %v938
        %v1100 = vunpack.c.h.b16 %v938
        %v1101 = vunpack.c.l.b16 %v939
        %v1102 = vunpack.c.h.b16 %v939
        %v1103 = vunpack.c.l.b16 %v940
        %v1104 = vunpack.c.h.b16 %v940
        %v1105 = vunpack.c.l.b16 %v941
        %v1106 = vunpack.c.h.b16 %v941
        %v1107 = vunpack.c.l.b16 %v942
        %v1108 = vunpack.c.h.b16 %v942
        %v1109 = vunpack.c.l.b16 %v943
        %v1110 = vunpack.c.h.b16 %v943
        %v1111 = vunpack.c.l.b16 %v944
        %v1112 = vunpack.c.h.b16 %v944
        %v1113 = vunpack.c.l.b16 %v945
        %v1114 = vunpack.c.h.b16 %v945
        %v1115 = vunpack.c.l.b16 %v946
        %v1116 = vunpack.c.h.b16 %v946
        %v1117 = vunpack.c.l.b16 %v947
        %v1118 = vunpack.c.h.b16 %v947
        %v1119 = vunpack.c.l.b16 %v948
        %v1120 = vunpack.c.h.b16 %v948
        %v1121 = vunpack.c.l.b16 %v949
        %v1122 = vunpack.c.h.b16 %v949
        %v1123 = vunpack.c.l.b16 %v950
        %v1124 = vunpack.c.h.b16 %v950
        %v1125 = vunpack.c.l.b16 %v951
        %v1126 = vunpack.c.h.b16 %v951
        %v1127 = vunpack.c.l.b16 %v952
        %v1128 = vunpack.c.h.b16 %v952
        %v1129 = vunpack.c.l.b16 %v953
        %v1130 = vunpack.c.h.b16 %v953
        %v1131 = vunpack.c.l.b16 %v954
        %v1132 = vunpack.c.h.b16 %v954
        %v1133 = vunpack.c.l.b16 %v955
        %v1134 = vunpack.c.h.b16 %v955
        %v1135 = vunpack.c.l.b16 %v956
        %v1136 = vunpack.c.h.b16 %v956
        %v1137 = vunpack.c.l.b16 %v957
        %v1138 = vunpack.c.h.b16 %v957
        %v1139 = vunpack.c.l.b16 %v958
        %v1140 = vunpack.c.h.b16 %v958
        %v1141 = vunpack.c.l.b16 %v959
        %v1142 = vunpack.c.h.b16 %v959
        %v1143 = vunpack.c.l.b16 %v960
        %v1144 = vunpack.c.h.b16 %v960
        %v1145 = vunpack.c.l.b16 %v961
        %v1146 = vunpack.c.h.b16 %v961
        %v1147 = vunpack.c.l.b16 %v962
        %v1148 = vunpack.c.h.b16 %v962
        %v1149 = vunpack.c.l.b16 %v963
        %v1150 = vunpack.c.h.b16 %v963
        %v1151 = vunpack.c.l.b16 %v964
        %v1152 = vunpack.c.h.b16 %v964
        %v1153 = vunpack.c.l.b16 %v965
        %v1154 = vunpack.c.h.b16 %v965
        %v1155 = vunpack.c.l.b16 %v966
        %v1156 = vunpack.c.h.b16 %v966
        %v1157 = vunpack.c.l.b16 %v967
        %v1158 = vunpack.c.h.b16 %v967
        %v1159 = vunpack.c.l.b16 %v968
        %v1160 = vunpack.c.h.b16 %v968
        %v1161 = vpack.c.b16 %v1041, %v1033
        %v1162 = vpack.c.b16 %v1042, %v1034
        %v1163 = vpack.c.b16 %v1043, %v1035
        %v1164 = vpack.c.b16 %v1044, %v1036
        %v1165 = vpack.c.b16 %v1045, %v1037
        %v1166 = vpack.c.b16 %v1046, %v1038
        %v1167 = vpack.c.b16 %v1047, %v1039
        %v1168 = vpack.c.b16 %v1048, %v1040
        %v1169 = vpack.c.b16 %v1057, %v1049
        %v1170 = vpack.c.b16 %v1058, %v1050
        %v1171 = vpack.c.b16 %v1059, %v1051
        %v1172 = vpack.c.b16 %v1060, %v1052
        %v1173 = vpack.c.b16 %v1061, %v1053
        %v1174 = vpack.c.b16 %v1062, %v1054
        %v1175 = vpack.c.b16 %v1063, %v1055
        %v1176 = vpack.c.b16 %v1064, %v1056
        %v1177 = vpack.c.b16 %v1073, %v1065
        %v1178 = vpack.c.b16 %v1074, %v1066
        %v1179 = vpack.c.b16 %v1075, %v1067
        %v1180 = vpack.c.b16 %v1076, %v1068
        %v1181 = vpack.c.b16 %v1077, %v1069
        %v1182 = vpack.c.b16 %v1078, %v1070
        %v1183 = vpack.c.b16 %v1079, %v1071
        %v1184 = vpack.c.b16 %v1080, %v1072
        %v1185 = vpack.c.b16 %v1089, %v1081
        %v1186 = vpack.c.b16 %v1090, %v1082
        %v1187 = vpack.c.b16 %v1091, %v1083
        %v1188 = vpack.c.b16 %v1092, %v1084
        %v1189 = vpack.c.b16 %v1093, %v1085
        %v1190 = vpack.c.b16 %v1094, %v1086
        %v1191 = vpack.c.b16 %v1095, %v1087
        %v1192 = vpack.c.b16 %v1096, %v1088
        %v1193 = vpack.c.b16 %v1105, %v1097
        %v1194 = vpack.c.b16 %v1106, %v1098
        %v1195 = vpack.c.b16 %v1107, %v1099
        %v1196 = vpack.c.b16 %v1108, %v1100
        %v1197 = vpack.c.b16 %v1109, %v1101
        %v1198 = vpack.c.b16 %v1110, %v1102
        %v1199 = vpack.c.b16 %v1111, %v1103
        %v1200 = vpack.c.b16 %v1112, %v1104
        %v1201 = vpack.c.b16 %v1121, %v1113
        %v1202 = vpack.c.b16 %v1122, %v1114
        %v1203 = vpack.c.b16 %v1123, %v1115
        %v1204 = vpack.c.b16 %v1124, %v1116
        %v1205 = vpack.c.b16 %v1125, %v1117
        %v1206 = vpack.c.b16 %v1126, %v1118
        %v1207 = vpack.c.b16 %v1127, %v1119
        %v1208 = vpack.c.b16 %v1128, %v1120
        %v1209 = vpack.c.b16 %v1137, %v1129
        %v1210 = vpack.c.b16 %v1138, %v1130
        %v1211 = vpack.c.b16 %v1139, %v1131
        %v1212 = vpack.c.b16 %v1140, %v1132
        %v1213 = vpack.c.b16 %v1141, %v1133
        %v1214 = vpack.c.b16 %v1142, %v1134
        %v1215 = vpack.c.b16 %v1143, %v1135
        %v1216 = vpack.c.b16 %v1144, %v1136
        %v1217 = vpack.c.b16 %v1153, %v1145
        %v1218 = vpack.c.b16 %v1154, %v1146
        %v1219 = vpack.c.b16 %v1155, %v1147
        %v1220 = vpack.c.b16 %v1156, %v1148
        %v1221 = vpack.c.b16 %v1157, %v1149
        %v1222 = vpack.c.b16 %v1158, %v1150
        %v1223 = vpack.c.b16 %v1159, %v1151
        %v1224 = vpack.c.b16 %v1160, %v1152
        %1289 = vmatpush.bf16.msra.mxu0 %v1217
        %1290 = vmatpush.bf16.msra.mxu0 %v1209
        %1291 = vmatpush.bf16.msra.mxu0 %v1201
        %1292 = vmatpush.bf16.msra.mxu0 %v1193
        %1293 = vmatpush.bf16.msra.mxu0 %v1185
        %1294 = vmatpush.bf16.msra.mxu0 %v1177
        %1295 = vmatpush.bf16.msra.mxu0 %v1169
        %1296 = vmatpush.bf16.msra.mxu0 %v1161
        %1297 = vmatmul.bf16.gmra.mxu0 %v889
        %v1298 = vpop.f32.mrf.mxu0
        %v1299 = vadd.f32 0.0, %v1298
        %v1300 = vpop.f32.mrf.mxu0
        %v1301 = vadd.f32 0.0, %v1300
        %1302 = vmatmul.bf16.gmra.mxu0 %v890
        %v1303 = vpop.f32.mrf.mxu0
        %v1304 = vadd.f32 0.0, %v1303
        %v1305 = vpop.f32.mrf.mxu0
        %v1306 = vadd.f32 0.0, %v1305
        %1307 = vmatmul.bf16.gmra.mxu0 %v891
        %v1308 = vpop.f32.mrf.mxu0
        %v1309 = vadd.f32 0.0, %v1308
        %v1310 = vpop.f32.mrf.mxu0
        %v1311 = vadd.f32 0.0, %v1310
        %1312 = vmatmul.bf16.gmra.mxu0 %v892
        %v1313 = vpop.f32.mrf.mxu0
        %v1314 = vadd.f32 0.0, %v1313
        %v1315 = vpop.f32.mrf.mxu0
        %v1316 = vadd.f32 0.0, %v1315
        %1317 = vmatmul.bf16.gmra.mxu0 %v893
        %v1318 = vpop.f32.mrf.mxu0
        %v1319 = vadd.f32 0.0, %v1318
        %v1320 = vpop.f32.mrf.mxu0
        %v1321 = vadd.f32 0.0, %v1320
        %1322 = vmatmul.bf16.gmra.mxu0 %v894
        %v1323 = vpop.f32.mrf.mxu0
        %v1324 = vadd.f32 0.0, %v1323
        %v1325 = vpop.f32.mrf.mxu0
        %v1326 = vadd.f32 0.0, %v1325
        %1327 = vmatmul.bf16.gmra.mxu0 %v895
        %v1328 = vpop.f32.mrf.mxu0
        %v1329 = vadd.f32 0.0, %v1328
        %v1330 = vpop.f32.mrf.mxu0
        %v1331 = vadd.f32 0.0, %v1330
        %1332 = vmatmul.bf16.gmra.mxu0 %v896
        %v1333 = vpop.f32.mrf.mxu0
        %v1334 = vadd.f32 0.0, %v1333
        %v1335 = vpop.f32.mrf.mxu0
        %v1336 = vadd.f32 0.0, %v1335
        %1337 = vmatmul.bf16.gmra.mxu0 %v897
        %v1338 = vpop.f32.mrf.mxu0
        %v1339 = vadd.f32 0.0, %v1338
        %v1340 = vpop.f32.mrf.mxu0
        %v1341 = vadd.f32 0.0, %v1340
        %1342 = vmatmul.bf16.gmra.mxu0 %v898
        %v1343 = vpop.f32.mrf.mxu0
        %v1344 = vadd.f32 0.0, %v1343
        %v1345 = vpop.f32.mrf.mxu0
        %v1346 = vadd.f32 0.0, %v1345
        %1347 = vmatmul.bf16.gmra.mxu0 %v899
        %v1348 = vpop.f32.mrf.mxu0
        %v1349 = vadd.f32 0.0, %v1348
        %v1350 = vpop.f32.mrf.mxu0
        %v1351 = vadd.f32 0.0, %v1350
        %1352 = vmatmul.bf16.gmra.mxu0 %v900
        %v1353 = vpop.f32.mrf.mxu0
        %v1354 = vadd.f32 0.0, %v1353
        %v1355 = vpop.f32.mrf.mxu0
        %v1356 = vadd.f32 0.0, %v1355
        %1357 = vmatmul.bf16.gmra.mxu0 %v901
        %v1358 = vpop.f32.mrf.mxu0
        %v1359 = vadd.f32 0.0, %v1358
        %v1360 = vpop.f32.mrf.mxu0
        %v1361 = vadd.f32 0.0, %v1360
        %1362 = vmatmul.bf16.gmra.mxu0 %v902
        %v1363 = vpop.f32.mrf.mxu0
        %v1364 = vadd.f32 0.0, %v1363
        %v1365 = vpop.f32.mrf.mxu0
        %v1366 = vadd.f32 0.0, %v1365
        %1367 = vmatmul.bf16.gmra.mxu0 %v903
        %v1368 = vpop.f32.mrf.mxu0
        %v1369 = vadd.f32 0.0, %v1368
        %v1370 = vpop.f32.mrf.mxu0
        %v1371 = vadd.f32 0.0, %v1370
        %1372 = vmatmul.bf16.gmra.mxu0 %v904
        %v1373 = vpop.f32.mrf.mxu0
        %v1374 = vadd.f32 0.0, %v1373
        %v1375 = vpop.f32.mrf.mxu0
        %v1376 = vadd.f32 0.0, %v1375
        %1377 = vdwg.mxu0
        %1378 = vmatpush.bf16.msra.mxu0 %v1218
        %1379 = vmatpush.bf16.msra.mxu0 %v1210
        %1380 = vmatpush.bf16.msra.mxu0 %v1202
        %1381 = vmatpush.bf16.msra.mxu0 %v1194
        %1382 = vmatpush.bf16.msra.mxu0 %v1186
        %1383 = vmatpush.bf16.msra.mxu0 %v1178
        %1384 = vmatpush.bf16.msra.mxu0 %v1170
        %1385 = vmatpush.bf16.msra.mxu0 %v1162
        %1386 = vmatmul.bf16.gmra.mxu0 %v889
        %v1387 = vpop.f32.mrf.mxu0
        %v1388 = vadd.f32 0.0, %v1387
        %v1389 = vpop.f32.mrf.mxu0
        %v1390 = vadd.f32 0.0, %v1389
        %1391 = vmatmul.bf16.gmra.mxu0 %v890
        %v1392 = vpop.f32.mrf.mxu0
        %v1393 = vadd.f32 0.0, %v1392
        %v1394 = vpop.f32.mrf.mxu0
        %v1395 = vadd.f32 0.0, %v1394
        %1396 = vmatmul.bf16.gmra.mxu0 %v891
        %v1397 = vpop.f32.mrf.mxu0
        %v1398 = vadd.f32 0.0, %v1397
        %v1399 = vpop.f32.mrf.mxu0
        %v1400 = vadd.f32 0.0, %v1399
        %1401 = vmatmul.bf16.gmra.mxu0 %v892
        %v1402 = vpop.f32.mrf.mxu0
        %v1403 = vadd.f32 0.0, %v1402
        %v1404 = vpop.f32.mrf.mxu0
        %v1405 = vadd.f32 0.0, %v1404
        %1406 = vmatmul.bf16.gmra.mxu0 %v893
        %v1407 = vpop.f32.mrf.mxu0
        %v1408 = vadd.f32 0.0, %v1407
        %v1409 = vpop.f32.mrf.mxu0
        %v1410 = vadd.f32 0.0, %v1409
        %1411 = vmatmul.bf16.gmra.mxu0 %v894
        %v1412 = vpop.f32.mrf.mxu0
        %v1413 = vadd.f32 0.0, %v1412
        %v1414 = vpop.f32.mrf.mxu0
        %v1415 = vadd.f32 0.0, %v1414
        %1416 = vmatmul.bf16.gmra.mxu0 %v895
        %v1417 = vpop.f32.mrf.mxu0
        %v1418 = vadd.f32 0.0, %v1417
        %v1419 = vpop.f32.mrf.mxu0
        %v1420 = vadd.f32 0.0, %v1419
        %1421 = vmatmul.bf16.gmra.mxu0 %v896
        %v1422 = vpop.f32.mrf.mxu0
        %v1423 = vadd.f32 0.0, %v1422
        %v1424 = vpop.f32.mrf.mxu0
        %v1425 = vadd.f32 0.0, %v1424
        %1426 = vmatmul.bf16.gmra.mxu0 %v897
        %v1427 = vpop.f32.mrf.mxu0
        %v1428 = vadd.f32 0.0, %v1427
        %v1429 = vpop.f32.mrf.mxu0
        %v1430 = vadd.f32 0.0, %v1429
        %1431 = vmatmul.bf16.gmra.mxu0 %v898
        %v1432 = vpop.f32.mrf.mxu0
        %v1433 = vadd.f32 0.0, %v1432
        %v1434 = vpop.f32.mrf.mxu0
        %v1435 = vadd.f32 0.0, %v1434
        %1436 = vmatmul.bf16.gmra.mxu0 %v899
        %v1437 = vpop.f32.mrf.mxu0
        %v1438 = vadd.f32 0.0, %v1437
        %v1439 = vpop.f32.mrf.mxu0
        %v1440 = vadd.f32 0.0, %v1439
        %1441 = vmatmul.bf16.gmra.mxu0 %v900
        %v1442 = vpop.f32.mrf.mxu0
        %v1443 = vadd.f32 0.0, %v1442
        %v1444 = vpop.f32.mrf.mxu0
        %v1445 = vadd.f32 0.0, %v1444
        %1446 = vmatmul.bf16.gmra.mxu0 %v901
        %v1447 = vpop.f32.mrf.mxu0
        %v1448 = vadd.f32 0.0, %v1447
        %v1449 = vpop.f32.mrf.mxu0
        %v1450 = vadd.f32 0.0, %v1449
        %1451 = vmatmul.bf16.gmra.mxu0 %v902
        %v1452 = vpop.f32.mrf.mxu0
        %v1453 = vadd.f32 0.0, %v1452
        %v1454 = vpop.f32.mrf.mxu0
        %v1455 = vadd.f32 0.0, %v1454
        %1456 = vmatmul.bf16.gmra.mxu0 %v903
        %v1457 = vpop.f32.mrf.mxu0
        %v1458 = vadd.f32 0.0, %v1457
        %v1459 = vpop.f32.mrf.mxu0
        %v1460 = vadd.f32 0.0, %v1459
        %1461 = vmatmul.bf16.gmra.mxu0 %v904
        %v1462 = vpop.f32.mrf.mxu0
        %v1463 = vadd.f32 0.0, %v1462
        %v1464 = vpop.f32.mrf.mxu0
        %v1465 = vadd.f32 0.0, %v1464
        %1466 = vdwg.mxu0
        %1467 = vmatpush.bf16.msra.mxu0 %v1219
        %1468 = vmatpush.bf16.msra.mxu0 %v1211
        %1469 = vmatpush.bf16.msra.mxu0 %v1203
        %1470 = vmatpush.bf16.msra.mxu0 %v1195
        %1471 = vmatpush.bf16.msra.mxu0 %v1187
        %1472 = vmatpush.bf16.msra.mxu0 %v1179
        %1473 = vmatpush.bf16.msra.mxu0 %v1171
        %1474 = vmatpush.bf16.msra.mxu0 %v1163
        %1475 = vmatmul.bf16.gmra.mxu0 %v889
        %v1476 = vpop.f32.mrf.mxu0
        %v1477 = vadd.f32 0.0, %v1476
        %v1478 = vpop.f32.mrf.mxu0
        %v1479 = vadd.f32 0.0, %v1478
        %1480 = vmatmul.bf16.gmra.mxu0 %v890
        %v1481 = vpop.f32.mrf.mxu0
        %v1482 = vadd.f32 0.0, %v1481
        %v1483 = vpop.f32.mrf.mxu0
        %v1484 = vadd.f32 0.0, %v1483
        %1485 = vmatmul.bf16.gmra.mxu0 %v891
        %v1486 = vpop.f32.mrf.mxu0
        %v1487 = vadd.f32 0.0, %v1486
        %v1488 = vpop.f32.mrf.mxu0
        %v1489 = vadd.f32 0.0, %v1488
        %1490 = vmatmul.bf16.gmra.mxu0 %v892
        %v1491 = vpop.f32.mrf.mxu0
        %v1492 = vadd.f32 0.0, %v1491
        %v1493 = vpop.f32.mrf.mxu0
        %v1494 = vadd.f32 0.0, %v1493
        %1495 = vmatmul.bf16.gmra.mxu0 %v893
        %v1496 = vpop.f32.mrf.mxu0
        %v1497 = vadd.f32 0.0, %v1496
        %v1498 = vpop.f32.mrf.mxu0
        %v1499 = vadd.f32 0.0, %v1498
        %1500 = vmatmul.bf16.gmra.mxu0 %v894
        %v1501 = vpop.f32.mrf.mxu0
        %v1502 = vadd.f32 0.0, %v1501
        %v1503 = vpop.f32.mrf.mxu0
        %v1504 = vadd.f32 0.0, %v1503
        %1505 = vmatmul.bf16.gmra.mxu0 %v895
        %v1506 = vpop.f32.mrf.mxu0
        %v1507 = vadd.f32 0.0, %v1506
        %v1508 = vpop.f32.mrf.mxu0
        %v1509 = vadd.f32 0.0, %v1508
        %1510 = vmatmul.bf16.gmra.mxu0 %v896
        %v1511 = vpop.f32.mrf.mxu0
        %v1512 = vadd.f32 0.0, %v1511
        %v1513 = vpop.f32.mrf.mxu0
        %v1514 = vadd.f32 0.0, %v1513
        %1515 = vmatmul.bf16.gmra.mxu0 %v897
        %v1516 = vpop.f32.mrf.mxu0
        %v1517 = vadd.f32 0.0, %v1516
        %v1518 = vpop.f32.mrf.mxu0
        %v1519 = vadd.f32 0.0, %v1518
        %1520 = vmatmul.bf16.gmra.mxu0 %v898
        %v1521 = vpop.f32.mrf.mxu0
        %v1522 = vadd.f32 0.0, %v1521
        %v1523 = vpop.f32.mrf.mxu0
        %v1524 = vadd.f32 0.0, %v1523
        %1525 = vmatmul.bf16.gmra.mxu0 %v899
        %v1526 = vpop.f32.mrf.mxu0
        %v1527 = vadd.f32 0.0, %v1526
        %v1528 = vpop.f32.mrf.mxu0
        %v1529 = vadd.f32 0.0, %v1528
        %1530 = vmatmul.bf16.gmra.mxu0 %v900
        %v1531 = vpop.f32.mrf.mxu0
        %v1532 = vadd.f32 0.0, %v1531
        %v1533 = vpop.f32.mrf.mxu0
        %v1534 = vadd.f32 0.0, %v1533
        %1535 = vmatmul.bf16.gmra.mxu0 %v901
        %v1536 = vpop.f32.mrf.mxu0
        %v1537 = vadd.f32 0.0, %v1536
        %v1538 = vpop.f32.mrf.mxu0
        %v1539 = vadd.f32 0.0, %v1538
        %1540 = vmatmul.bf16.gmra.mxu0 %v902
        %v1541 = vpop.f32.mrf.mxu0
        %v1542 = vadd.f32 0.0, %v1541
        %v1543 = vpop.f32.mrf.mxu0
        %v1544 = vadd.f32 0.0, %v1543
        %1545 = vmatmul.bf16.gmra.mxu0 %v903
        %v1546 = vpop.f32.mrf.mxu0
        %v1547 = vadd.f32 0.0, %v1546
        %v1548 = vpop.f32.mrf.mxu0
        %v1549 = vadd.f32 0.0, %v1548
        %1550 = vmatmul.bf16.gmra.mxu0 %v904
        %v1551 = vpop.f32.mrf.mxu0
        %v1552 = vadd.f32 0.0, %v1551
        %v1553 = vpop.f32.mrf.mxu0
        %v1554 = vadd.f32 0.0, %v1553
        %1555 = vdwg.mxu0
        %1556 = vmatpush.bf16.msra.mxu0 %v1220
        %1557 = vmatpush.bf16.msra.mxu0 %v1212
        %1558 = vmatpush.bf16.msra.mxu0 %v1204
        %1559 = vmatpush.bf16.msra.mxu0 %v1196
        %1560 = vmatpush.bf16.msra.mxu0 %v1188
        %1561 = vmatpush.bf16.msra.mxu0 %v1180
        %1562 = vmatpush.bf16.msra.mxu0 %v1172
        %1563 = vmatpush.bf16.msra.mxu0 %v1164
        %1564 = vmatmul.bf16.gmra.mxu0 %v889
        %v1565 = vpop.f32.mrf.mxu0
        %v1566 = vadd.f32 0.0, %v1565
        %v1567 = vpop.f32.mrf.mxu0
        %v1568 = vadd.f32 0.0, %v1567
        %1569 = vmatmul.bf16.gmra.mxu0 %v890
        %v1570 = vpop.f32.mrf.mxu0
        %v1571 = vadd.f32 0.0, %v1570
        %v1572 = vpop.f32.mrf.mxu0
        %v1573 = vadd.f32 0.0, %v1572
        %1574 = vmatmul.bf16.gmra.mxu0 %v891
        %v1575 = vpop.f32.mrf.mxu0
        %v1576 = vadd.f32 0.0, %v1575
        %v1577 = vpop.f32.mrf.mxu0
        %v1578 = vadd.f32 0.0, %v1577
        %1579 = vmatmul.bf16.gmra.mxu0 %v892
        %v1580 = vpop.f32.mrf.mxu0
        %v1581 = vadd.f32 0.0, %v1580
        %v1582 = vpop.f32.mrf.mxu0
        %v1583 = vadd.f32 0.0, %v1582
        %1584 = vmatmul.bf16.gmra.mxu0 %v893
        %v1585 = vpop.f32.mrf.mxu0
        %v1586 = vadd.f32 0.0, %v1585
        %v1587 = vpop.f32.mrf.mxu0
        %v1588 = vadd.f32 0.0, %v1587
        %1589 = vmatmul.bf16.gmra.mxu0 %v894
        %v1590 = vpop.f32.mrf.mxu0
        %v1591 = vadd.f32 0.0, %v1590
        %v1592 = vpop.f32.mrf.mxu0
        %v1593 = vadd.f32 0.0, %v1592
        %1594 = vmatmul.bf16.gmra.mxu0 %v895
        %v1595 = vpop.f32.mrf.mxu0
        %v1596 = vadd.f32 0.0, %v1595
        %v1597 = vpop.f32.mrf.mxu0
        %v1598 = vadd.f32 0.0, %v1597
        %1599 = vmatmul.bf16.gmra.mxu0 %v896
        %v1600 = vpop.f32.mrf.mxu0
        %v1601 = vadd.f32 0.0, %v1600
        %v1602 = vpop.f32.mrf.mxu0
        %v1603 = vadd.f32 0.0, %v1602
        %1604 = vmatmul.bf16.gmra.mxu0 %v897
        %v1605 = vpop.f32.mrf.mxu0
        %v1606 = vadd.f32 0.0, %v1605
        %v1607 = vpop.f32.mrf.mxu0
        %v1608 = vadd.f32 0.0, %v1607
        %1609 = vmatmul.bf16.gmra.mxu0 %v898
        %v1610 = vpop.f32.mrf.mxu0
        %v1611 = vadd.f32 0.0, %v1610
        %v1612 = vpop.f32.mrf.mxu0
        %v1613 = vadd.f32 0.0, %v1612
        %1614 = vmatmul.bf16.gmra.mxu0 %v899
        %v1615 = vpop.f32.mrf.mxu0
        %v1616 = vadd.f32 0.0, %v1615
        %v1617 = vpop.f32.mrf.mxu0
        %v1618 = vadd.f32 0.0, %v1617
        %1619 = vmatmul.bf16.gmra.mxu0 %v900
        %v1620 = vpop.f32.mrf.mxu0
        %v1621 = vadd.f32 0.0, %v1620
        %v1622 = vpop.f32.mrf.mxu0
        %v1623 = vadd.f32 0.0, %v1622
        %1624 = vmatmul.bf16.gmra.mxu0 %v901
        %v1625 = vpop.f32.mrf.mxu0
        %v1626 = vadd.f32 0.0, %v1625
        %v1627 = vpop.f32.mrf.mxu0
        %v1628 = vadd.f32 0.0, %v1627
        %1629 = vmatmul.bf16.gmra.mxu0 %v902
        %v1630 = vpop.f32.mrf.mxu0
        %v1631 = vadd.f32 0.0, %v1630
        %v1632 = vpop.f32.mrf.mxu0
        %v1633 = vadd.f32 0.0, %v1632
        %1634 = vmatmul.bf16.gmra.mxu0 %v903
        %v1635 = vpop.f32.mrf.mxu0
        %v1636 = vadd.f32 0.0, %v1635
        %v1637 = vpop.f32.mrf.mxu0
        %v1638 = vadd.f32 0.0, %v1637
        %1639 = vmatmul.bf16.gmra.mxu0 %v904
        %v1640 = vpop.f32.mrf.mxu0
        %v1641 = vadd.f32 0.0, %v1640
        %v1642 = vpop.f32.mrf.mxu0
        %v1643 = vadd.f32 0.0, %v1642
        %1644 = vdwg.mxu0
        %1645 = vmatpush.bf16.msra.mxu0 %v1221
        %1646 = vmatpush.bf16.msra.mxu0 %v1213
        %1647 = vmatpush.bf16.msra.mxu0 %v1205
        %1648 = vmatpush.bf16.msra.mxu0 %v1197
        %1649 = vmatpush.bf16.msra.mxu0 %v1189
        %1650 = vmatpush.bf16.msra.mxu0 %v1181
        %1651 = vmatpush.bf16.msra.mxu0 %v1173
        %1652 = vmatpush.bf16.msra.mxu0 %v1165
        %1653 = vmatmul.bf16.gmra.mxu0 %v889
        %v1654 = vpop.f32.mrf.mxu0
        %v1655 = vadd.f32 0.0, %v1654
        %v1656 = vpop.f32.mrf.mxu0
        %v1657 = vadd.f32 0.0, %v1656
        %1658 = vmatmul.bf16.gmra.mxu0 %v890
        %v1659 = vpop.f32.mrf.mxu0
        %v1660 = vadd.f32 0.0, %v1659
        %v1661 = vpop.f32.mrf.mxu0
        %v1662 = vadd.f32 0.0, %v1661
        %1663 = vmatmul.bf16.gmra.mxu0 %v891
        %v1664 = vpop.f32.mrf.mxu0
        %v1665 = vadd.f32 0.0, %v1664
        %v1666 = vpop.f32.mrf.mxu0
        %v1667 = vadd.f32 0.0, %v1666
        %1668 = vmatmul.bf16.gmra.mxu0 %v892
        %v1669 = vpop.f32.mrf.mxu0
        %v1670 = vadd.f32 0.0, %v1669
        %v1671 = vpop.f32.mrf.mxu0
        %v1672 = vadd.f32 0.0, %v1671
        %1673 = vmatmul.bf16.gmra.mxu0 %v893
        %v1674 = vpop.f32.mrf.mxu0
        %v1675 = vadd.f32 0.0, %v1674
        %v1676 = vpop.f32.mrf.mxu0
        %v1677 = vadd.f32 0.0, %v1676
        %1678 = vmatmul.bf16.gmra.mxu0 %v894
        %v1679 = vpop.f32.mrf.mxu0
        %v1680 = vadd.f32 0.0, %v1679
        %v1681 = vpop.f32.mrf.mxu0
        %v1682 = vadd.f32 0.0, %v1681
        %1683 = vmatmul.bf16.gmra.mxu0 %v895
        %v1684 = vpop.f32.mrf.mxu0
        %v1685 = vadd.f32 0.0, %v1684
        %v1686 = vpop.f32.mrf.mxu0
        %v1687 = vadd.f32 0.0, %v1686
        %1688 = vmatmul.bf16.gmra.mxu0 %v896
        %v1689 = vpop.f32.mrf.mxu0
        %v1690 = vadd.f32 0.0, %v1689
        %v1691 = vpop.f32.mrf.mxu0
        %v1692 = vadd.f32 0.0, %v1691
        %1693 = vmatmul.bf16.gmra.mxu0 %v897
        %v1694 = vpop.f32.mrf.mxu0
        %v1695 = vadd.f32 0.0, %v1694
        %v1696 = vpop.f32.mrf.mxu0
        %v1697 = vadd.f32 0.0, %v1696
        %1698 = vmatmul.bf16.gmra.mxu0 %v898
        %v1699 = vpop.f32.mrf.mxu0
        %v1700 = vadd.f32 0.0, %v1699
        %v1701 = vpop.f32.mrf.mxu0
        %v1702 = vadd.f32 0.0, %v1701
        %1703 = vmatmul.bf16.gmra.mxu0 %v899
        %v1704 = vpop.f32.mrf.mxu0
        %v1705 = vadd.f32 0.0, %v1704
        %v1706 = vpop.f32.mrf.mxu0
        %v1707 = vadd.f32 0.0, %v1706
        %1708 = vmatmul.bf16.gmra.mxu0 %v900
        %v1709 = vpop.f32.mrf.mxu0
        %v1710 = vadd.f32 0.0, %v1709
        %v1711 = vpop.f32.mrf.mxu0
        %v1712 = vadd.f32 0.0, %v1711
        %1713 = vmatmul.bf16.gmra.mxu0 %v901
        %v1714 = vpop.f32.mrf.mxu0
        %v1715 = vadd.f32 0.0, %v1714
        %v1716 = vpop.f32.mrf.mxu0
        %v1717 = vadd.f32 0.0, %v1716
        %1718 = vmatmul.bf16.gmra.mxu0 %v902
        %v1719 = vpop.f32.mrf.mxu0
        %v1720 = vadd.f32 0.0, %v1719
        %v1721 = vpop.f32.mrf.mxu0
        %v1722 = vadd.f32 0.0, %v1721
        %1723 = vmatmul.bf16.gmra.mxu0 %v903
        %v1724 = vpop.f32.mrf.mxu0
        %v1725 = vadd.f32 0.0, %v1724
        %v1726 = vpop.f32.mrf.mxu0
        %v1727 = vadd.f32 0.0, %v1726
        %1728 = vmatmul.bf16.gmra.mxu0 %v904
        %v1729 = vpop.f32.mrf.mxu0
        %v1730 = vadd.f32 0.0, %v1729
        %v1731 = vpop.f32.mrf.mxu0
        %v1732 = vadd.f32 0.0, %v1731
        %1733 = vdwg.mxu0
        %1734 = vmatpush.bf16.msra.mxu0 %v1222
        %1735 = vmatpush.bf16.msra.mxu0 %v1214
        %1736 = vmatpush.bf16.msra.mxu0 %v1206
        %1737 = vmatpush.bf16.msra.mxu0 %v1198
        %1738 = vmatpush.bf16.msra.mxu0 %v1190
        %1739 = vmatpush.bf16.msra.mxu0 %v1182
        %1740 = vmatpush.bf16.msra.mxu0 %v1174
        %1741 = vmatpush.bf16.msra.mxu0 %v1166
        %1742 = vmatmul.bf16.gmra.mxu0 %v889
        %v1743 = vpop.f32.mrf.mxu0
        %v1744 = vadd.f32 0.0, %v1743
        %v1745 = vpop.f32.mrf.mxu0
        %v1746 = vadd.f32 0.0, %v1745
        %1747 = vmatmul.bf16.gmra.mxu0 %v890
        %v1748 = vpop.f32.mrf.mxu0
        %v1749 = vadd.f32 0.0, %v1748
        %v1750 = vpop.f32.mrf.mxu0
        %v1751 = vadd.f32 0.0, %v1750
        %1752 = vmatmul.bf16.gmra.mxu0 %v891
        %v1753 = vpop.f32.mrf.mxu0
        %v1754 = vadd.f32 0.0, %v1753
        %v1755 = vpop.f32.mrf.mxu0
        %v1756 = vadd.f32 0.0, %v1755
        %1757 = vmatmul.bf16.gmra.mxu0 %v892
        %v1758 = vpop.f32.mrf.mxu0
        %v1759 = vadd.f32 0.0, %v1758
        %v1760 = vpop.f32.mrf.mxu0
        %v1761 = vadd.f32 0.0, %v1760
        %1762 = vmatmul.bf16.gmra.mxu0 %v893
        %v1763 = vpop.f32.mrf.mxu0
        %v1764 = vadd.f32 0.0, %v1763
        %v1765 = vpop.f32.mrf.mxu0
        %v1766 = vadd.f32 0.0, %v1765
        %1767 = vmatmul.bf16.gmra.mxu0 %v894
        %v1768 = vpop.f32.mrf.mxu0
        %v1769 = vadd.f32 0.0, %v1768
        %v1770 = vpop.f32.mrf.mxu0
        %v1771 = vadd.f32 0.0, %v1770
        %1772 = vmatmul.bf16.gmra.mxu0 %v895
        %v1773 = vpop.f32.mrf.mxu0
        %v1774 = vadd.f32 0.0, %v1773
        %v1775 = vpop.f32.mrf.mxu0
        %v1776 = vadd.f32 0.0, %v1775
        %1777 = vmatmul.bf16.gmra.mxu0 %v896
        %v1778 = vpop.f32.mrf.mxu0
        %v1779 = vadd.f32 0.0, %v1778
        %v1780 = vpop.f32.mrf.mxu0
        %v1781 = vadd.f32 0.0, %v1780
        %1782 = vmatmul.bf16.gmra.mxu0 %v897
        %v1783 = vpop.f32.mrf.mxu0
        %v1784 = vadd.f32 0.0, %v1783
        %v1785 = vpop.f32.mrf.mxu0
        %v1786 = vadd.f32 0.0, %v1785
        %1787 = vmatmul.bf16.gmra.mxu0 %v898
        %v1788 = vpop.f32.mrf.mxu0
        %v1789 = vadd.f32 0.0, %v1788
        %v1790 = vpop.f32.mrf.mxu0
        %v1791 = vadd.f32 0.0, %v1790
        %1792 = vmatmul.bf16.gmra.mxu0 %v899
        %v1793 = vpop.f32.mrf.mxu0
        %v1794 = vadd.f32 0.0, %v1793
        %v1795 = vpop.f32.mrf.mxu0
        %v1796 = vadd.f32 0.0, %v1795
        %1797 = vmatmul.bf16.gmra.mxu0 %v900
        %v1798 = vpop.f32.mrf.mxu0
        %v1799 = vadd.f32 0.0, %v1798
        %v1800 = vpop.f32.mrf.mxu0
        %v1801 = vadd.f32 0.0, %v1800
        %1802 = vmatmul.bf16.gmra.mxu0 %v901
        %v1803 = vpop.f32.mrf.mxu0
        %v1804 = vadd.f32 0.0, %v1803
        %v1805 = vpop.f32.mrf.mxu0
        %v1806 = vadd.f32 0.0, %v1805
        %1807 = vmatmul.bf16.gmra.mxu0 %v902
        %v1808 = vpop.f32.mrf.mxu0
        %v1809 = vadd.f32 0.0, %v1808
        %v1810 = vpop.f32.mrf.mxu0
        %v1811 = vadd.f32 0.0, %v1810
        %1812 = vmatmul.bf16.gmra.mxu0 %v903
        %v1813 = vpop.f32.mrf.mxu0
        %v1814 = vadd.f32 0.0, %v1813
        %v1815 = vpop.f32.mrf.mxu0
        %v1816 = vadd.f32 0.0, %v1815
        %1817 = vmatmul.bf16.gmra.mxu0 %v904
        %v1818 = vpop.f32.mrf.mxu0
        %v1819 = vadd.f32 0.0, %v1818
        %v1820 = vpop.f32.mrf.mxu0
        %v1821 = vadd.f32 0.0, %v1820
        %1822 = vdwg.mxu0
        %1823 = vmatpush.bf16.msra.mxu0 %v1223
        %1824 = vmatpush.bf16.msra.mxu0 %v1215
        %1825 = vmatpush.bf16.msra.mxu0 %v1207
        %1826 = vmatpush.bf16.msra.mxu0 %v1199
        %1827 = vmatpush.bf16.msra.mxu0 %v1191
        %1828 = vmatpush.bf16.msra.mxu0 %v1183
        %1829 = vmatpush.bf16.msra.mxu0 %v1175
        %1830 = vmatpush.bf16.msra.mxu0 %v1167
        %1831 = vmatmul.bf16.gmra.mxu0 %v889
        %v1832 = vpop.f32.mrf.mxu0
        %v1833 = vadd.f32 0.0, %v1832
        %v1834 = vpop.f32.mrf.mxu0
        %v1835 = vadd.f32 0.0, %v1834
        %1836 = vmatmul.bf16.gmra.mxu0 %v890
        %v1837 = vpop.f32.mrf.mxu0
        %v1838 = vadd.f32 0.0, %v1837
        %v1839 = vpop.f32.mrf.mxu0
        %v1840 = vadd.f32 0.0, %v1839
        %1841 = vmatmul.bf16.gmra.mxu0 %v891
        %v1842 = vpop.f32.mrf.mxu0
        %v1843 = vadd.f32 0.0, %v1842
        %v1844 = vpop.f32.mrf.mxu0
        %v1845 = vadd.f32 0.0, %v1844
        %1846 = vmatmul.bf16.gmra.mxu0 %v892
        %v1847 = vpop.f32.mrf.mxu0
        %v1848 = vadd.f32 0.0, %v1847
        %v1849 = vpop.f32.mrf.mxu0
        %v1850 = vadd.f32 0.0, %v1849
        %1851 = vmatmul.bf16.gmra.mxu0 %v893
        %v1852 = vpop.f32.mrf.mxu0
        %v1853 = vadd.f32 0.0, %v1852
        %v1854 = vpop.f32.mrf.mxu0
        %v1855 = vadd.f32 0.0, %v1854
        %1856 = vmatmul.bf16.gmra.mxu0 %v894
        %v1857 = vpop.f32.mrf.mxu0
        %v1858 = vadd.f32 0.0, %v1857
        %v1859 = vpop.f32.mrf.mxu0
        %v1860 = vadd.f32 0.0, %v1859
        %1861 = vmatmul.bf16.gmra.mxu0 %v895
        %v1862 = vpop.f32.mrf.mxu0
        %v1863 = vadd.f32 0.0, %v1862
        %v1864 = vpop.f32.mrf.mxu0
        %v1865 = vadd.f32 0.0, %v1864
        %1866 = vmatmul.bf16.gmra.mxu0 %v896
        %v1867 = vpop.f32.mrf.mxu0
        %v1868 = vadd.f32 0.0, %v1867
        %v1869 = vpop.f32.mrf.mxu0
        %v1870 = vadd.f32 0.0, %v1869
        %1871 = vmatmul.bf16.gmra.mxu0 %v897
        %v1872 = vpop.f32.mrf.mxu0
        %v1873 = vadd.f32 0.0, %v1872
        %v1874 = vpop.f32.mrf.mxu0
        %v1875 = vadd.f32 0.0, %v1874
        %1876 = vmatmul.bf16.gmra.mxu0 %v898
        %v1877 = vpop.f32.mrf.mxu0
        %v1878 = vadd.f32 0.0, %v1877
        %v1879 = vpop.f32.mrf.mxu0
        %v1880 = vadd.f32 0.0, %v1879
        %1881 = vmatmul.bf16.gmra.mxu0 %v899
        %v1882 = vpop.f32.mrf.mxu0
        %v1883 = vadd.f32 0.0, %v1882
        %v1884 = vpop.f32.mrf.mxu0
        %v1885 = vadd.f32 0.0, %v1884
        %1886 = vmatmul.bf16.gmra.mxu0 %v900
        %v1887 = vpop.f32.mrf.mxu0
        %v1888 = vadd.f32 0.0, %v1887
        %v1889 = vpop.f32.mrf.mxu0
        %v1890 = vadd.f32 0.0, %v1889
        %1891 = vmatmul.bf16.gmra.mxu0 %v901
        %v1892 = vpop.f32.mrf.mxu0
        %v1893 = vadd.f32 0.0, %v1892
        %v1894 = vpop.f32.mrf.mxu0
        %v1895 = vadd.f32 0.0, %v1894
        %1896 = vmatmul.bf16.gmra.mxu0 %v902
        %v1897 = vpop.f32.mrf.mxu0
        %v1898 = vadd.f32 0.0, %v1897
        %v1899 = vpop.f32.mrf.mxu0
        %v1900 = vadd.f32 0.0, %v1899
        %1901 = vmatmul.bf16.gmra.mxu0 %v903
        %v1902 = vpop.f32.mrf.mxu0
        %v1903 = vadd.f32 0.0, %v1902
        %v1904 = vpop.f32.mrf.mxu0
        %v1905 = vadd.f32 0.0, %v1904
        %1906 = vmatmul.bf16.gmra.mxu0 %v904
        %v1907 = vpop.f32.mrf.mxu0
        %v1908 = vadd.f32 0.0, %v1907
        %v1909 = vpop.f32.mrf.mxu0
        %v1910 = vadd.f32 0.0, %v1909
        %1911 = vdwg.mxu0
        %1912 = vmatpush.bf16.msra.mxu0 %v1224
        %1913 = vmatpush.bf16.msra.mxu0 %v1216
        %1914 = vmatpush.bf16.msra.mxu0 %v1208
        %1915 = vmatpush.bf16.msra.mxu0 %v1200
        %1916 = vmatpush.bf16.msra.mxu0 %v1192
        %1917 = vmatpush.bf16.msra.mxu0 %v1184
        %1918 = vmatpush.bf16.msra.mxu0 %v1176
        %1919 = vmatpush.bf16.msra.mxu0 %v1168
        %1920 = vmatmul.bf16.gmra.mxu0 %v889
        %v1921 = vpop.f32.mrf.mxu0
        %v1922 = vadd.f32 0.0, %v1921
        %v1923 = vpop.f32.mrf.mxu0
        %v1924 = vadd.f32 0.0, %v1923
        %1925 = vmatmul.bf16.gmra.mxu0 %v890
        %v1926 = vpop.f32.mrf.mxu0
        %v1927 = vadd.f32 0.0, %v1926
        %v1928 = vpop.f32.mrf.mxu0
        %v1929 = vadd.f32 0.0, %v1928
        %1930 = vmatmul.bf16.gmra.mxu0 %v891
        %v1931 = vpop.f32.mrf.mxu0
        %v1932 = vadd.f32 0.0, %v1931
        %v1933 = vpop.f32.mrf.mxu0
        %v1934 = vadd.f32 0.0, %v1933
        %1935 = vmatmul.bf16.gmra.mxu0 %v892
        %v1936 = vpop.f32.mrf.mxu0
        %v1937 = vadd.f32 0.0, %v1936
        %v1938 = vpop.f32.mrf.mxu0
        %v1939 = vadd.f32 0.0, %v1938
        %1940 = vmatmul.bf16.gmra.mxu0 %v893
        %v1941 = vpop.f32.mrf.mxu0
        %v1942 = vadd.f32 0.0, %v1941
        %v1943 = vpop.f32.mrf.mxu0
        %v1944 = vadd.f32 0.0, %v1943
        %1945 = vmatmul.bf16.gmra.mxu0 %v894
        %v1946 = vpop.f32.mrf.mxu0
        %v1947 = vadd.f32 0.0, %v1946
        %v1948 = vpop.f32.mrf.mxu0
        %v1949 = vadd.f32 0.0, %v1948
        %1950 = vmatmul.bf16.gmra.mxu0 %v895
        %v1951 = vpop.f32.mrf.mxu0
        %v1952 = vadd.f32 0.0, %v1951
        %v1953 = vpop.f32.mrf.mxu0
        %v1954 = vadd.f32 0.0, %v1953
        %1955 = vmatmul.bf16.gmra.mxu0 %v896
        %v1956 = vpop.f32.mrf.mxu0
        %v1957 = vadd.f32 0.0, %v1956
        %v1958 = vpop.f32.mrf.mxu0
        %v1959 = vadd.f32 0.0, %v1958
        %1960 = vmatmul.bf16.gmra.mxu0 %v897
        %v1961 = vpop.f32.mrf.mxu0
        %v1962 = vadd.f32 0.0, %v1961
        %v1963 = vpop.f32.mrf.mxu0
        %v1964 = vadd.f32 0.0, %v1963
        %1965 = vmatmul.bf16.gmra.mxu0 %v898
        %v1966 = vpop.f32.mrf.mxu0
        %v1967 = vadd.f32 0.0, %v1966
        %v1968 = vpop.f32.mrf.mxu0
        %v1969 = vadd.f32 0.0, %v1968
        %1970 = vmatmul.bf16.gmra.mxu0 %v899
        %v1971 = vpop.f32.mrf.mxu0
        %v1972 = vadd.f32 0.0, %v1971
        %v1973 = vpop.f32.mrf.mxu0
        %v1974 = vadd.f32 0.0, %v1973
        %1975 = vmatmul.bf16.gmra.mxu0 %v900
        %v1976 = vpop.f32.mrf.mxu0
        %v1977 = vadd.f32 0.0, %v1976
        %v1978 = vpop.f32.mrf.mxu0
        %v1979 = vadd.f32 0.0, %v1978
        %1980 = vmatmul.bf16.gmra.mxu0 %v901
        %v1981 = vpop.f32.mrf.mxu0
        %v1982 = vadd.f32 0.0, %v1981
        %v1983 = vpop.f32.mrf.mxu0
        %v1984 = vadd.f32 0.0, %v1983
        %1985 = vmatmul.bf16.gmra.mxu0 %v902
        %v1986 = vpop.f32.mrf.mxu0
        %v1987 = vadd.f32 0.0, %v1986
        %v1988 = vpop.f32.mrf.mxu0
        %v1989 = vadd.f32 0.0, %v1988
        %1990 = vmatmul.bf16.gmra.mxu0 %v903
        %v1991 = vpop.f32.mrf.mxu0
        %v1992 = vadd.f32 0.0, %v1991
        %v1993 = vpop.f32.mrf.mxu0
        %v1994 = vadd.f32 0.0, %v1993
        %1995 = vmatmul.bf16.gmra.mxu0 %v904
        %v1996 = vpop.f32.mrf.mxu0
        %v1997 = vadd.f32 0.0, %v1996
        %v1998 = vpop.f32.mrf.mxu0
        %v1999 = vadd.f32 0.0, %v1998
        %2000 = vdwg.mxu0
        %v2001 = vld [vmem:[#allocation2] sm:$0xff]
        %v2002 = vmax.f32 %v1299, %v1301
        %v2003 = vmax.f32 %v2002, %v1304
        %v2004 = vmax.f32 %v2003, %v1306
        %v2005 = vmax.f32 %v2004, %v1309
        %v2006 = vmax.f32 %v2005, %v1311
        %v2007 = vmax.f32 %v2006, %v1314
        %v2008 = vmax.f32 %v2007, %v1316
        %v2009 = vmax.f32 %v2008, %v1319
        %v2010 = vmax.f32 %v2009, %v1321
        %v2011 = vmax.f32 %v2010, %v1324
        %v2012 = vmax.f32 %v2011, %v1326
        %v2013 = vmax.f32 %v2012, %v1329
        %v2014 = vmax.f32 %v2013, %v1331
        %v2015 = vmax.f32 %v2014, %v1334
        %v2016 = vmax.f32 %v2015, %v1336
        %v2017 = vmax.f32 %v2016, %v1339
        %v2018 = vmax.f32 %v2017, %v1341
        %v2019 = vmax.f32 %v2018, %v1344
        %v2020 = vmax.f32 %v2019, %v1346
        %v2021 = vmax.f32 %v2020, %v1349
        %v2022 = vmax.f32 %v2021, %v1351
        %v2023 = vmax.f32 %v2022, %v1354
        %v2024 = vmax.f32 %v2023, %v1356
        %v2025 = vmax.f32 %v2024, %v1359
        %v2026 = vmax.f32 %v2025, %v1361
        %v2027 = vmax.f32 %v2026, %v1364
        %v2028 = vmax.f32 %v2027, %v1366
        %v2029 = vmax.f32 %v2028, %v1369
        %v2030 = vmax.f32 %v2029, %v1371
        %v2031 = vmax.f32 %v2030, %v1374
        %v2032 = vmax.f32 %v2031, %v1376
        %v2033 = vrot.slane %v2032, 4
        %v2034 = vmax.f32 %v2032, %v2033
        %v2035 = vrot.slane %v2034, 2
        %v2036 = vmax.f32 %v2034, %v2035
        %v2037 = vrot.slane %v2036, 1
        %v2038 = vmax.f32 %v2036, %v2037
        %v2039 = vmax.f32 %v1388, %v1390
        %v2040 = vmax.f32 %v2039, %v1393
        %v2041 = vmax.f32 %v2040, %v1395
        %v2042 = vmax.f32 %v2041, %v1398
        %v2043 = vmax.f32 %v2042, %v1400
        %v2044 = vmax.f32 %v2043, %v1403
        %v2045 = vmax.f32 %v2044, %v1405
        %v2046 = vmax.f32 %v2045, %v1408
        %v2047 = vmax.f32 %v2046, %v1410
        %v2048 = vmax.f32 %v2047, %v1413
        %v2049 = vmax.f32 %v2048, %v1415
        %v2050 = vmax.f32 %v2049, %v1418
        %v2051 = vmax.f32 %v2050, %v1420
        %v2052 = vmax.f32 %v2051, %v1423
        %v2053 = vmax.f32 %v2052, %v1425
        %v2054 = vmax.f32 %v2053, %v1428
        %v2055 = vmax.f32 %v2054, %v1430
        %v2056 = vmax.f32 %v2055, %v1433
        %v2057 = vmax.f32 %v2056, %v1435
        %v2058 = vmax.f32 %v2057, %v1438
        %v2059 = vmax.f32 %v2058, %v1440
        %v2060 = vmax.f32 %v2059, %v1443
        %v2061 = vmax.f32 %v2060, %v1445
        %v2062 = vmax.f32 %v2061, %v1448
        %v2063 = vmax.f32 %v2062, %v1450
        %v2064 = vmax.f32 %v2063, %v1453
        %v2065 = vmax.f32 %v2064, %v1455
        %v2066 = vmax.f32 %v2065, %v1458
        %v2067 = vmax.f32 %v2066, %v1460
        %v2068 = vmax.f32 %v2067, %v1463
        %v2069 = vmax.f32 %v2068, %v1465
        %v2070 = vrot.slane %v2069, 4
        %v2071 = vmax.f32 %v2069, %v2070
        %v2072 = vrot.slane %v2071, 2
        %v2073 = vmax.f32 %v2071, %v2072
        %v2074 = vrot.slane %v2073, 1
        %v2075 = vmax.f32 %v2073, %v2074
        %v2076 = vmax.f32 %v1477, %v1479
        %v2077 = vmax.f32 %v2076, %v1482
        %v2078 = vmax.f32 %v2077, %v1484
        %v2079 = vmax.f32 %v2078, %v1487
        %v2080 = vmax.f32 %v2079, %v1489
        %v2081 = vmax.f32 %v2080, %v1492
        %v2082 = vmax.f32 %v2081, %v1494
        %v2083 = vmax.f32 %v2082, %v1497
        %v2084 = vmax.f32 %v2083, %v1499
        %v2085 = vmax.f32 %v2084, %v1502
        %v2086 = vmax.f32 %v2085, %v1504
        %v2087 = vmax.f32 %v2086, %v1507
        %v2088 = vmax.f32 %v2087, %v1509
        %v2089 = vmax.f32 %v2088, %v1512
        %v2090 = vmax.f32 %v2089, %v1514
        %v2091 = vmax.f32 %v2090, %v1517
        %v2092 = vmax.f32 %v2091, %v1519
        %v2093 = vmax.f32 %v2092, %v1522
        %v2094 = vmax.f32 %v2093, %v1524
        %v2095 = vmax.f32 %v2094, %v1527
        %v2096 = vmax.f32 %v2095, %v1529
        %v2097 = vmax.f32 %v2096, %v1532
        %v2098 = vmax.f32 %v2097, %v1534
        %v2099 = vmax.f32 %v2098, %v1537
        %v2100 = vmax.f32 %v2099, %v1539
        %v2101 = vmax.f32 %v2100, %v1542
        %v2102 = vmax.f32 %v2101, %v1544
        %v2103 = vmax.f32 %v2102, %v1547
        %v2104 = vmax.f32 %v2103, %v1549
        %v2105 = vmax.f32 %v2104, %v1552
        %v2106 = vmax.f32 %v2105, %v1554
        %v2107 = vrot.slane %v2106, 4
        %v2108 = vmax.f32 %v2106, %v2107
        %v2109 = vrot.slane %v2108, 2
        %v2110 = vmax.f32 %v2108, %v2109
        %v2111 = vrot.slane %v2110, 1
        %v2112 = vmax.f32 %v2110, %v2111
        %v2113 = vmax.f32 %v1566, %v1568
        %v2114 = vmax.f32 %v2113, %v1571
        %v2115 = vmax.f32 %v2114, %v1573
        %v2116 = vmax.f32 %v2115, %v1576
        %v2117 = vmax.f32 %v2116, %v1578
        %v2118 = vmax.f32 %v2117, %v1581
        %v2119 = vmax.f32 %v2118, %v1583
        %v2120 = vmax.f32 %v2119, %v1586
        %v2121 = vmax.f32 %v2120, %v1588
        %v2122 = vmax.f32 %v2121, %v1591
        %v2123 = vmax.f32 %v2122, %v1593
        %v2124 = vmax.f32 %v2123, %v1596
        %v2125 = vmax.f32 %v2124, %v1598
        %v2126 = vmax.f32 %v2125, %v1601
        %v2127 = vmax.f32 %v2126, %v1603
        %v2128 = vmax.f32 %v2127, %v1606
        %v2129 = vmax.f32 %v2128, %v1608
        %v2130 = vmax.f32 %v2129, %v1611
        %v2131 = vmax.f32 %v2130, %v1613
        %v2132 = vmax.f32 %v2131, %v1616
        %v2133 = vmax.f32 %v2132, %v1618
        %v2134 = vmax.f32 %v2133, %v1621
        %v2135 = vmax.f32 %v2134, %v1623
        %v2136 = vmax.f32 %v2135, %v1626
        %v2137 = vmax.f32 %v2136, %v1628
        %v2138 = vmax.f32 %v2137, %v1631
        %v2139 = vmax.f32 %v2138, %v1633
        %v2140 = vmax.f32 %v2139, %v1636
        %v2141 = vmax.f32 %v2140, %v1638
        %v2142 = vmax.f32 %v2141, %v1641
        %v2143 = vmax.f32 %v2142, %v1643
        %v2144 = vrot.slane %v2143, 4
        %v2145 = vmax.f32 %v2143, %v2144
        %v2146 = vrot.slane %v2145, 2
        %v2147 = vmax.f32 %v2145, %v2146
        %v2148 = vrot.slane %v2147, 1
        %v2149 = vmax.f32 %v2147, %v2148
        %v2150 = vmax.f32 %v1655, %v1657
        %v2151 = vmax.f32 %v2150, %v1660
        %v2152 = vmax.f32 %v2151, %v1662
        %v2153 = vmax.f32 %v2152, %v1665
        %v2154 = vmax.f32 %v2153, %v1667
        %v2155 = vmax.f32 %v2154, %v1670
        %v2156 = vmax.f32 %v2155, %v1672
        %v2157 = vmax.f32 %v2156, %v1675
        %v2158 = vmax.f32 %v2157, %v1677
        %v2159 = vmax.f32 %v2158, %v1680
        %v2160 = vmax.f32 %v2159, %v1682
        %v2161 = vmax.f32 %v2160, %v1685
        %v2162 = vmax.f32 %v2161, %v1687
        %v2163 = vmax.f32 %v2162, %v1690
        %v2164 = vmax.f32 %v2163, %v1692
        %v2165 = vmax.f32 %v2164, %v1695
        %v2166 = vmax.f32 %v2165, %v1697
        %v2167 = vmax.f32 %v2166, %v1700
        %v2168 = vmax.f32 %v2167, %v1702
        %v2169 = vmax.f32 %v2168, %v1705
        %v2170 = vmax.f32 %v2169, %v1707
        %v2171 = vmax.f32 %v2170, %v1710
        %v2172 = vmax.f32 %v2171, %v1712
        %v2173 = vmax.f32 %v2172, %v1715
        %v2174 = vmax.f32 %v2173, %v1717
        %v2175 = vmax.f32 %v2174, %v1720
        %v2176 = vmax.f32 %v2175, %v1722
        %v2177 = vmax.f32 %v2176, %v1725
        %v2178 = vmax.f32 %v2177, %v1727
        %v2179 = vmax.f32 %v2178, %v1730
        %v2180 = vmax.f32 %v2179, %v1732
        %v2181 = vrot.slane %v2180, 4
        %v2182 = vmax.f32 %v2180, %v2181
        %v2183 = vrot.slane %v2182, 2
        %v2184 = vmax.f32 %v2182, %v2183
        %v2185 = vrot.slane %v2184, 1
        %v2186 = vmax.f32 %v2184, %v2185
        %v2187 = vmax.f32 %v1744, %v1746
        %v2188 = vmax.f32 %v2187, %v1749
        %v2189 = vmax.f32 %v2188, %v1751
        %v2190 = vmax.f32 %v2189, %v1754
        %v2191 = vmax.f32 %v2190, %v1756
        %v2192 = vmax.f32 %v2191, %v1759
        %v2193 = vmax.f32 %v2192, %v1761
        %v2194 = vmax.f32 %v2193, %v1764
        %v2195 = vmax.f32 %v2194, %v1766
        %v2196 = vmax.f32 %v2195, %v1769
        %v2197 = vmax.f32 %v2196, %v1771
        %v2198 = vmax.f32 %v2197, %v1774
        %v2199 = vmax.f32 %v2198, %v1776
        %v2200 = vmax.f32 %v2199, %v1779
        %v2201 = vmax.f32 %v2200, %v1781
        %v2202 = vmax.f32 %v2201, %v1784
        %v2203 = vmax.f32 %v2202, %v1786
        %v2204 = vmax.f32 %v2203, %v1789
        %v2205 = vmax.f32 %v2204, %v1791
        %v2206 = vmax.f32 %v2205, %v1794
        %v2207 = vmax.f32 %v2206, %v1796
        %v2208 = vmax.f32 %v2207, %v1799
        %v2209 = vmax.f32 %v2208, %v1801
        %v2210 = vmax.f32 %v2209, %v1804
        %v2211 = vmax.f32 %v2210, %v1806
        %v2212 = vmax.f32 %v2211, %v1809
        %v2213 = vmax.f32 %v2212, %v1811
        %v2214 = vmax.f32 %v2213, %v1814
        %v2215 = vmax.f32 %v2214, %v1816
        %v2216 = vmax.f32 %v2215, %v1819
        %v2217 = vmax.f32 %v2216, %v1821
        %v2218 = vrot.slane %v2217, 4
        %v2219 = vmax.f32 %v2217, %v2218
        %v2220 = vrot.slane %v2219, 2
        %v2221 = vmax.f32 %v2219, %v2220
        %v2222 = vrot.slane %v2221, 1
        %v2223 = vmax.f32 %v2221, %v2222
        %v2224 = vmax.f32 %v1833, %v1835
        %v2225 = vmax.f32 %v2224, %v1838
        %v2226 = vmax.f32 %v2225, %v1840
        %v2227 = vmax.f32 %v2226, %v1843
        %v2228 = vmax.f32 %v2227, %v1845
        %v2229 = vmax.f32 %v2228, %v1848
        %v2230 = vmax.f32 %v2229, %v1850
        %v2231 = vmax.f32 %v2230, %v1853
        %v2232 = vmax.f32 %v2231, %v1855
        %v2233 = vmax.f32 %v2232, %v1858
        %v2234 = vmax.f32 %v2233, %v1860
        %v2235 = vmax.f32 %v2234, %v1863
        %v2236 = vmax.f32 %v2235, %v1865
        %v2237 = vmax.f32 %v2236, %v1868
        %v2238 = vmax.f32 %v2237, %v1870
        %v2239 = vmax.f32 %v2238, %v1873
        %v2240 = vmax.f32 %v2239, %v1875
        %v2241 = vmax.f32 %v2240, %v1878
        %v2242 = vmax.f32 %v2241, %v1880
        %v2243 = vmax.f32 %v2242, %v1883
        %v2244 = vmax.f32 %v2243, %v1885
        %v2245 = vmax.f32 %v2244, %v1888
        %v2246 = vmax.f32 %v2245, %v1890
        %v2247 = vmax.f32 %v2246, %v1893
        %v2248 = vmax.f32 %v2247, %v1895
        %v2249 = vmax.f32 %v2248, %v1898
        %v2250 = vmax.f32 %v2249, %v1900
        %v2251 = vmax.f32 %v2250, %v1903
        %v2252 = vmax.f32 %v2251, %v1905
        %v2253 = vmax.f32 %v2252, %v1908
        %v2254 = vmax.f32 %v2253, %v1910
        %v2255 = vrot.slane %v2254, 4
        %v2256 = vmax.f32 %v2254, %v2255
        %v2257 = vrot.slane %v2256, 2
        %v2258 = vmax.f32 %v2256, %v2257
        %v2259 = vrot.slane %v2258, 1
        %v2260 = vmax.f32 %v2258, %v2259
        %v2261 = vmax.f32 %v1922, %v1924
        %v2262 = vmax.f32 %v2261, %v1927
        %v2263 = vmax.f32 %v2262, %v1929
        %v2264 = vmax.f32 %v2263, %v1932
        %v2265 = vmax.f32 %v2264, %v1934
        %v2266 = vmax.f32 %v2265, %v1937
        %v2267 = vmax.f32 %v2266, %v1939
        %v2268 = vmax.f32 %v2267, %v1942
        %v2269 = vmax.f32 %v2268, %v1944
        %v2270 = vmax.f32 %v2269, %v1947
        %v2271 = vmax.f32 %v2270, %v1949
        %v2272 = vmax.f32 %v2271, %v1952
        %v2273 = vmax.f32 %v2272, %v1954
        %v2274 = vmax.f32 %v2273, %v1957
        %v2275 = vmax.f32 %v2274, %v1959
        %v2276 = vmax.f32 %v2275, %v1962
        %v2277 = vmax.f32 %v2276, %v1964
        %v2278 = vmax.f32 %v2277, %v1967
        %v2279 = vmax.f32 %v2278, %v1969
        %v2280 = vmax.f32 %v2279, %v1972
        %v2281 = vmax.f32 %v2280, %v1974
        %v2282 = vmax.f32 %v2281, %v1977
        %v2283 = vmax.f32 %v2282, %v1979
        %v2284 = vmax.f32 %v2283, %v1982
        %v2285 = vmax.f32 %v2284, %v1984
        %v2286 = vmax.f32 %v2285, %v1987
        %v2287 = vmax.f32 %v2286, %v1989
        %v2288 = vmax.f32 %v2287, %v1992
        %v2289 = vmax.f32 %v2288, %v1994
        %v2290 = vmax.f32 %v2289, %v1997
        %v2291 = vmax.f32 %v2290, %v1999
        %v2292 = vrot.slane %v2291, 4
        %v2293 = vmax.f32 %v2291, %v2292
        %v2294 = vrot.slane %v2293, 2
        %v2295 = vmax.f32 %v2293, %v2294
        %v2296 = vrot.slane %v2295, 1
        %v2297 = vmax.f32 %v2295, %v2296
        %v2306 = vrot.slane %v2075, 7
        %v2307 = vrot.slane %v2112, 6
        %v2308 = vrot.slane %v2149, 5
        %v2309 = vrot.slane %v2186, 4
        %v2310 = vrot.slane %v2223, 3
        %v2311 = vrot.slane %v2260, 2
        %v2312 = vrot.slane %v2297, 1
        %vm2313 = vcmask 1040384
        %v2314 = vsel %vm2313, %v2038, %v2306
        %vm2315 = vcmask 1042434
        %v2316 = vsel %vm2315, %v2307, %v2308
        %vm2317 = vcmask 1041408
        %v2318 = vsel %vm2317, %v2314, %v2316
        %vm2319 = vcmask 1044484
        %v2320 = vsel %vm2319, %v2309, %v2310
        %vm2321 = vcmask 1046534
        %v2322 = vsel %vm2321, %v2311, %v2312
        %vm2323 = vcmask 1045508
        %v2324 = vsel %vm2323, %v2320, %v2322
        %vm2325 = vcmask 1043456
        %v2326 = vsel %vm2325, %v2318, %v2324
        %v2328 = vmax.f32 %v2001, %v2326
        %2329 = vst [vmem:[#allocation2] sm:$0xff] %v2328
        %p2330 = scmp.eq.s32.totalorder %s26, 1
        // Predicated region
        $region57: #{tpu_custom_call.1} parent=47 // pred_check
          %p2331 = pneg %p2330
        $region58: #{tpu_custom_call.1} parent=47 // pred_check_branch
          %2333 = sbr.rel (%p2331) target = $region60
        $region59: #{tpu_custom_call.1} parent=47 // pred_region
          %v2334 = vld [vmem:[#allocation2] sm:$0xff]
          %v2335 = vld [vmem:[%s6] sm:$0xff]
          %v2336 = vadd.f32 %v2334, %v2335
          %v2337 = vmax.f32 %v2336, 0.0
          %v2339 = vperm.slane %v2337, 0
          %v2340 = vperm.slane %v2337, 1
          %v2341 = vperm.slane %v2337, 2
          %v2342 = vperm.slane %v2337, 3
          %v2343 = vperm.slane %v2337, 4
          %v2344 = vperm.slane %v2337, 5
          %v2345 = vperm.slane %v2337, 6
          %v2346 = vperm.slane %v2337, 7
          %v2355 = vpack.c.bf16 %v2340, %v2339
          %v2356 = vpack.c.bf16 %v2342, %v2341
          %v2357 = vpack.c.bf16 %v2344, %v2343
          %v2358 = vpack.c.bf16 %v2346, %v2345
          %v2363 = vrot.slane %v2355, 3
          %v2364 = vrot.slane %v2356, 6
          %v2365 = vrot.slane %v2356, 1
          %v2366 = vrot.slane %v2357, 4
          %v2367 = vrot.slane %v2357, 7
          %v2368 = vrot.slane %v2358, 2
          %v2369 = vrot.slane %v2358, 5
          %v2372 = vsel %vm2313, %v2355, %v2363
          %v2375 = vsel %vm2315, %v2364, %v2365
          %v2376 = vsel %vm2317, %v2372, %v2375
          %v2379 = vsel %vm2319, %v2366, %v2367
          %v2382 = vsel %vm2321, %v2368, %v2369
          %v2383 = vsel %vm2323, %v2379, %v2382
          %v2384 = vsel %vm2325, %v2376, %v2383
          %vm2386 = vcmask 1040384
          %vm2387 = vsmask.f32 256
          %vm2388 = vmand %vm2386, %vm2387
          %vm2389 = vcmask 1041409
          %vm2390 = vsmask.f32 1280
          %vm2391 = vmand %vm2389, %vm2390
          %vm2392 = vmor %vm2391, %vm2388
          %vm2393 = vcmask 1042434
          %vm2394 = vsmask.f32 2304
          %vm2395 = vmand %vm2393, %vm2394
          %vm2396 = vmor %vm2395, %vm2392
          %vm2397 = vcmask 1043459
          %vm2398 = vsmask.f32 3328
          %vm2399 = vmand %vm2397, %vm2398
          %vm2400 = vmor %vm2399, %vm2396
          %vm2401 = vcmask 1044484
          %vm2402 = vsmask.f32 4352
          %vm2403 = vmand %vm2401, %vm2402
          %vm2404 = vmor %vm2403, %vm2400
          %vm2405 = vcmask 1045509
          %vm2406 = vsmask.f32 5376
          %vm2407 = vmand %vm2405, %vm2406
          %vm2408 = vmor %vm2407, %vm2404
          %vm2409 = vcmask 1046534
          %vm2410 = vsmask.f32 6400
          %vm2411 = vmand %vm2409, %vm2410
          %vm2412 = vmor %vm2411, %vm2408
          %vm2413 = vcmask 1047559
          %vm2414 = vsmask.f32 7424
          %vm2415 = vmand %vm2413, %vm2414
          %vm2416 = vmor %vm2415, %vm2412
          %v2417 = vld [vmem:[%s352] sm:$0xff]
          %v2418 = vsel %vm2416, %v2384, %v2417
          %2419 = vst [vmem:[%s352] sm:$0xff] %v2418
        $region60: #{tpu_custom_call.1} parent=47 // pred_fallthru
          _
        %p2420 = scmp.lt.s32.totalorder %s24, 1
        %s2421 = scalar_select %p2420, %s24, 1
        %p2422 = scmp.lt.s32.totalorder %s25, 0
        %s2423 = scalar_select %p2422, %s25, 0
        %s2424 = smul.addr %s2423, 8
        %s2425 = smul.addr %s2421, 8
        %s2426 = sadd.s32 %s2424, %s2425
        %s2427 = scalar_lea.vmem %s7, %s2426
        // Predicated region
        $region61: #{tpu_custom_call.1} parent=47 // pred_check
          %p2428 = pneg %p216
        $region62: #{tpu_custom_call.1} parent=47 // pred_check_branch
          %2430 = sbr.rel (%p2428) target = $region64
        $region63: #{tpu_custom_call.1} parent=47 // pred_region
          _
        $region64: #{tpu_custom_call.1} parent=47 // pred_fallthru
          _
      $region48: #{tpu_custom_call.1} parent=5 // pred_fallthru
        _
      %p2431 = scmp.le.s32.totalorder 2, %s14
      // Predicated region
      $region65: #{tpu_custom_call.1} parent=5 // pred_check
        %p2432 = pneg %p2431
      $region66: #{tpu_custom_call.1} parent=5 // pred_check_branch
        %2434 = sbr.rel (%p2432) target = $region68
      $region67: #{tpu_custom_call.1} parent=5 // pred_region
        %s2435 = ssub.s32 %s14, 2
        // Predicated region
        $region69: #{tpu_custom_call.1} parent=67 // pred_check
          %p2436 = pneg %p222
        $region70: #{tpu_custom_call.1} parent=67 // pred_check_branch
          %2438 = sbr.rel (%p2436) target = $region72
        $region71: #{tpu_custom_call.1} parent=67 // pred_region
          %p2439 = scmp.lt.s32.totalorder %s27, 1
          %s2440 = scalar_select %p2439, %s27, 1
          %p2441 = scmp.lt.s32.totalorder %s28, 0
          %s2442 = scalar_select %p2441, %s28, 0
          %s2443 = smul.addr %s2442, 8
          %s2444 = smul.addr %s2440, 8
          %s2445 = sadd.s32 %s2443, %s2444
          %s2446 = scalar_lea.vmem %s7, %s2445
        $region72: #{tpu_custom_call.1} parent=67 // pred_fallthru
          _
      $region68: #{tpu_custom_call.1} parent=5 // pred_fallthru
        _
    $region6: #{tpu_custom_call.1} parent=1 // loop_footer
      %s18 = sadd.s32 1, %s14
    $region7: #{tpu_custom_call.1} parent=1 // loop_footer_branch
      %13 = sbr.rel target = $region3
    $region8: #{tpu_custom_call.1} parent=1 // loop_exit
      _
    %2447 = vsyncpa [#allocation4], 1
    %s2448 = scalar_lea.sflag [#allocation4], 1
    %2449 = vsyncpa %s2448, 1

</llo_original>
